<compile_context>
chip_gen: v7x
topology: tpu7x:2x2x1
jax: 0.10.0
libtpu: 0.0.40
codegen_flags: <defaults>
</compile_context>

<pallas_src>
import functools

import jax
import jax.numpy as jnp
from jax.experimental import pallas as pl
from jax.experimental.pallas import tpu as pltpu


def _round_up(x, m):
    return ((x + m - 1) // m) * m


def _tpu_vmem_and_cores():
    """Physical VMEM bytes + TensorCore count (defensive query, safe fallback)."""
    vmem = 128 << 20
    try:
        info = pltpu.get_tpu_info()
        v = getattr(info, "vmem_capacity_bytes", None)
        if v:
            vmem = int(v)
    except Exception:
        pass
    # v7x is the 64 MiB-VMEM part and has 2 TensorCores per chip.
    n_tc = 2 if vmem <= (64 << 20) else 1
    return vmem, n_tc


def _pillar_kernel(pil_ref, aux_ref, w4_ref, wa_ref, wb_ref, bias_ref, out_ref, *,
                   n_points):
    """Per-tile pillar featurization; every tensor is lane-dense over pillars.

    pil_ref : (N, 4, TP)  feature-major pillars (point slot, [x,y,z,r], pillar)
    aux_ref : (4, TP)     rows = [anchor_x, anchor_y, npoints, 0]
    w4_ref  : (C, 4)      BN-scaled per-point weight for [x, y, z, r]
    wa_ref  : (C, 4)      BN-scaled anchor weight    for [ax, ay, 0, 0]
    wb_ref  : (C, 4)      BN-scaled center weight    for [cx, cy, cz, 0]
    bias_ref: (C, 1)      folded BN bias
    out_ref : (C, TP)     pooled features (lane-dense writeback)
    """
    pil = pil_ref[...]                                   # (N, 4, TP)
    aux = aux_ref[...]                                   # (4, TP)
    npts = aux[2:3, :]                                   # (1, TP) raw counts (float)
    w4 = w4_ref[...]                                     # (C, 4)

    # Per-pillar term t = WA @ [ax, ay, *, *] + WB @ center, center = (sum_n xyz)/n.
    # NOTE: like the reference, the sum runs over all N point slots (unmasked).
    sums = jnp.sum(pil, axis=0)                          # (4, TP); r-row gets 0 weight
    inv_n = pl.reciprocal(jnp.maximum(npts, 1.0), approx=True)   # EUP; guards empty pillars
    center = sums * inv_n                                # (4, TP)
    t = jnp.dot(wa_ref[...], aux, preferred_element_type=jnp.float32)
    t = t + jnp.dot(wb_ref[...], center, preferred_element_type=jnp.float32)  # (C, TP)

    # Per point slot: s_n = W4 @ pil[n] - t, masked to exactly 0 for padded slots
    # with a single fused select; running max over point slots.
    def point_term(n):
        s_n = jnp.dot(w4, pil[n], preferred_element_type=jnp.float32) - t     # (C, TP)
        return jnp.where(jnp.float32(n) < npts, s_n, 0.0)

    m = point_term(0)
    for n in range(1, n_points):
        m = jnp.maximum(m, point_term(n))

    # BN bias + ReLU commute with the max (monotone, padded slots are exact zeros,
    # conv has no bias) -> applied once per pillar instead of once per point.
    out_ref[...] = jnp.maximum(m + bias_ref[...], 0.0)


def pillar_encoder_forward(pillars, coors, npoints, conv_w, gamma, beta,
                           run_mean, run_var, *, voxel_size, point_cloud_range,
                           out_channel, bs, eps=1e-3, tile_p=4096):
    vx, vy = float(voxel_size[0]), float(voxel_size[1])
    x_offset = vx / 2 + point_cloud_range[0]
    y_offset = vy / 2 + point_cloud_range[1]
    x_l = int((point_cloud_range[3] - point_cloud_range[0]) / vx)
    y_l = int((point_cloud_range[4] - point_cloud_range[1]) / vy)

    P, N, _ = pillars.shape
    C = int(out_channel)

    # ---- fold BatchNorm (inference running stats) into conv weight / bias -------
    w9 = conv_w[:, :, 0].astype(jnp.float32)                       # (C, 9)
    inv_std = 1.0 / jnp.sqrt(run_var.astype(jnp.float32) + eps)
    scale = gamma.astype(jnp.float32) * inv_std                    # (C,)
    bias = beta.astype(jnp.float32) - run_mean.astype(jnp.float32) * scale
    ws = w9 * scale[:, None]                                       # (C, 9) scale folded
    # reference channel order: [xo, yo, z, r, ox, oy, oz, xo, yo]
    a0, a1 = ws[:, 0] + ws[:, 7], ws[:, 1] + ws[:, 8]              # duplicated x/y folded
    b0, b1, b2 = ws[:, 4], ws[:, 5], ws[:, 6]
    zc = jnp.zeros_like(a0)
    #   s = pil @ W4 - (WA @ [ax, ay, npts, 0] + WB @ center)   (restructured conv)
    w4 = jnp.stack([a0 + b0, a1 + b1, ws[:, 2] + b2, ws[:, 3]], axis=1)  # (C, 4)
    wa = jnp.stack([a0, a1, zc, zc], axis=1)                              # (C, 4)
    wb = jnp.stack([b0, b1, b2, zc], axis=1)                              # (C, 4)
    bias_c1 = bias.reshape(C, 1)

    # ---- generation-aware tile / VMEM sizing -------------------------------------
    vmem_cap, n_tc = _tpu_vmem_and_cores()
    if vmem_cap <= (64 << 20):            # v7x: 64 MiB physical VMEM, 2 TensorCores
        fp_gate, limit_cap = 40 << 20, 48 << 20
    else:                                  # v5e / v6e: 128 MiB physical VMEM, 1 TC
        fp_gate, limit_cap = 96 << 20, 100 << 20

    c_pad = _round_up(C, 8)

    def vmem_estimate(tp):
        pil_blk = N * 8 * tp * 4          # (N, 4->8 sublanes, tp)
        aux_blk = 8 * tp * 4              # (4->8, tp)
        out_blk = c_pad * tp * 4
        live = 5 * c_pad * tp * 4         # t, m, s_n + small temps
        wts = 4 * c_pad * 128 * 4
        return 2 * (pil_blk + aux_blk + out_blk) + live + wts + (1 << 20)

    min_tile = 128                         # lane multiple
    min_steps = 2 * n_tc                   # pipelining x TCs (relaxed on 1-TC parts)
    req = _round_up(max(int(tile_p), min_tile), min_tile)
    cap = _round_up(max(pl.cdiv(P, min_steps), 1), min_tile)
    tile_p = max(min(req, cap), min_tile)
    while tile_p > min_tile and vmem_estimate(tile_p) > fp_gate:
        tile_p = max(min_tile, _round_up(tile_p // 2, min_tile))
    vmem_limit = int(min(max(2 * vmem_estimate(tile_p), 32 << 20), limit_cap))

    P_pad = _round_up(P, tile_p)
    pad = P_pad - P

    # ---- lane-dense feature-major inputs: pillar axis on lanes -------------------
    # (one wrapper transpose pass; the kernel then streams dense (N,4,tile_p) blocks
    #  and every intermediate / the output stays lane-dense over the pillar axis)
    pil_t = jnp.transpose(pillars.astype(jnp.float32), (1, 2, 0))   # (N, 4, P)
    cof = coors.astype(jnp.float32)
    aux = jnp.stack([cof[:, 1] * vx + x_offset,
                     cof[:, 2] * vy + y_offset,
                     npoints.astype(jnp.float32),
                     jnp.zeros((P,), jnp.float32)], axis=0)         # (4, P)
    if pad:
        pil_t = jnp.pad(pil_t, ((0, 0), (0, 0), (0, pad)))
        aux = jnp.pad(aux, ((0, 0), (0, pad)))

    num_tiles = P_pad // tile_p
    kernel = functools.partial(_pillar_kernel, n_points=N)

    pooled_cp = pl.pallas_call(
        kernel,
        out_shape=jax.ShapeDtypeStruct((C, P_pad), jnp.float32),
        grid_spec=pltpu.PrefetchScalarGridSpec(
            num_scalar_prefetch=0,
            grid=(num_tiles,),
            in_specs=[
                pl.BlockSpec((N, 4, tile_p), lambda i: (0, 0, i)),   # pillars (feature-major)
                pl.BlockSpec((4, tile_p), lambda i: (0, i)),         # [ax, ay, npoints, 0]
                pl.BlockSpec((C, 4), lambda i: (0, 0)),              # W4 (per-point)
                pl.BlockSpec((C, 4), lambda i: (0, 0)),              # WA (anchor)
                pl.BlockSpec((C, 4), lambda i: (0, 0)),              # WB (center)
                pl.BlockSpec((C, 1), lambda i: (0, 0)),              # folded BN bias
            ],
            out_specs=pl.BlockSpec((C, tile_p), lambda i: (0, i)),
        ),
        compiler_params=pltpu.CompilerParams(
            dimension_semantics=("parallel",),
            vmem_limit_bytes=vmem_limit,
        ),
    )(pil_t, aux, w4, wa, wb, bias_c1)

    pooled = pooled_cp[:, :P].T                                     # (P, C)

    # BEV scatter: NHWC rows (contiguous C floats per pillar) + one transpose to
    # NCHW, instead of a 4-byte-granularity strided NCHW scatter.
    # TODO(synk): fuse as a Pallas kernel with coors scalar-prefetched into SMEM
    # driving a data-dependent output index_map.
    canvas = jnp.zeros((bs, y_l, x_l, C), jnp.float32)
    canvas = canvas.at[coors[:, 0], coors[:, 2], coors[:, 1], :].set(pooled)
    return jnp.transpose(canvas, (0, 3, 1, 2))                      # (bs, C, y_l, x_l)


def _reference_forward(pillars, coors, npoints, w9c, scale, bias, *,
                       vx, vy, x_offset, y_offset, x_l, y_l, bs):
    P, N, _ = pillars.shape
    npf = npoints.astype(jnp.float32)
    cof = coors.astype(jnp.float32)
    center = jnp.sum(pillars[:, :, :3], axis=1, keepdims=True) / npf[:, None, None]
    off = pillars[:, :, :3] - center
    xo = pillars[:, :, 0:1] - (cof[:, None, 1:2] * vx + x_offset)
    yo = pillars[:, :, 1:2] - (cof[:, None, 2:3] * vy + y_offset)
    feats = jnp.concatenate([xo, yo, pillars[:, :, 2:4], off, xo, yo], axis=-1)
    mask = (jnp.arange(N)[None, :] < npoints[:, None]).astype(jnp.float32)
    feats = feats * mask[:, :, None]
    y = jnp.einsum('pnk,kc->pnc', feats, w9c)
    y = jnp.maximum(y * scale + bias, 0.0)
    pooled = jnp.max(y, axis=1)
    canvas = jnp.zeros((bs, x_l, y_l, w9c.shape[1]), jnp.float32)
    canvas = canvas.at[coors[:, 0], coors[:, 1], coors[:, 2]].set(pooled)
    return jnp.transpose(canvas, (0, 3, 2, 1))


if __name__ == "__main__":
    key = jax.random.PRNGKey(0)
    ks = jax.random.split(key, 8)

    voxel_size = (0.5, 0.5, 4.0)
    point_cloud_range = (0.0, -4.0, -3.0, 8.0, 4.0, 1.0)
    in_channel, out_channel = 9, 32
    P, N, bs = 60, 8, 2          # P deliberately NOT a multiple of the tile size
    x_l = int((point_cloud_range[3] - point_cloud_range[0]) / voxel_size[0])   # 16
    y_l = int((point_cloud_range[4] - point_cloud_range[1]) / voxel_size[1])   # 16

    pillars = jax.random.normal(ks[0], (P, N, 4), jnp.float32)
    npoints = jax.random.randint(ks[1], (P,), 1, N + 1, dtype=jnp.int32)

    per_b = P // bs
    coors_rows = []
    for b in range(bs):
        cells = jax.random.permutation(jax.random.fold_in(ks[2], b), x_l * y_l)[:per_b]
        xs = (cells // y_l).astype(jnp.int32)
        ys = (cells % y_l).astype(jnp.int32)
        coors_rows.append(jnp.stack(
            [jnp.full((per_b,), b, jnp.int32), xs, ys,
             jnp.zeros((per_b,), jnp.int32)], axis=1))
    coors = jnp.concatenate(coors_rows, axis=0)          # (P, 4)

    conv_w = 0.1 * jax.random.normal(ks[3], (out_channel, in_channel, 1), jnp.float32)
    gamma = 1.0 + 0.1 * jax.random.normal(ks[4], (out_channel,), jnp.float32)
    beta = 0.1 * jax.random.normal(ks[5], (out_channel,), jnp.float32)
    run_mean = 0.05 * jax.random.normal(ks[6], (out_channel,), jnp.float32)
    run_var = jax.random.uniform(ks[7], (out_channel,), jnp.float32, 0.5, 1.5)

    out = pillar_encoder_forward(
        pillars, coors, npoints, conv_w, gamma, beta, run_mean, run_var,
        voxel_size=voxel_size, point_cloud_range=point_cloud_range,
        out_channel=out_channel, bs=bs)
    out = jax.block_until_ready(out)
    assert out.shape == (bs, out_channel, y_l, x_l), out.shape

    # cross-check the Pallas kernel against a pure-JAX reference
    eps = 1e-3
    w9c = conv_w[:, :, 0].T
    inv_std = 1.0 / jnp.sqrt(run_var + eps)
    scale = (gamma * inv_std).reshape(1, 1, out_channel)
    bias = (beta - run_mean * gamma * inv_std).reshape(1, 1, out_channel)
    ref = _reference_forward(
        pillars, coors, npoints, w9c, scale, bias,
        vx=voxel_size[0], vy=voxel_size[1],
        x_offset=voxel_size[0] / 2 + point_cloud_range[0],
        y_offset=voxel_size[1] / 2 + point_cloud_range[1],
        x_l=x_l, y_l=y_l, bs=bs)
    assert bool(jnp.allclose(out, ref, rtol=1e-3, atol=1e-3)), "mismatch vs JAX reference"

    print("KERNEL_OK")
</pallas_src>

<mosaic_0001>
module attributes {stable_mosaic.version = 11 : i64} {
  func.func @_pillar_kernel(%arg0: i32, %arg1: memref<8x4x128xf32, #tpu.memory_space<vmem>>, %arg2: memref<4x128xf32, #tpu.memory_space<vmem>>, %arg3: memref<32x4xf32, #tpu.memory_space<vmem>>, %arg4: memref<32x4xf32, #tpu.memory_space<vmem>>, %arg5: memref<32x4xf32, #tpu.memory_space<vmem>>, %arg6: memref<32x1xf32, #tpu.memory_space<vmem>>, %arg7: memref<32x128xf32, #tpu.memory_space<vmem>>) attributes {dimension_semantics = [#tpu.dimension_semantics<parallel>], iteration_bounds = array<i64: 1>, scalar_prefetch = 0 : i64, scratch_operands = 0 : i64, tpu.core_type = #tpu.core_type<tc>, window_params = [{transform_indices = @transform_0, window_bounds = array<i64: 8, 4, 128>}, {transform_indices = @transform_1, window_bounds = array<i64: 4, 128>}, {pipeline_mode = #tpu.pipeline_mode<synchronous>, transform_indices = @transform_2, window_bounds = array<i64: 32, 4>}, {pipeline_mode = #tpu.pipeline_mode<synchronous>, transform_indices = @transform_3, window_bounds = array<i64: 32, 4>}, {pipeline_mode = #tpu.pipeline_mode<synchronous>, transform_indices = @transform_4, window_bounds = array<i64: 32, 4>}, {pipeline_mode = #tpu.pipeline_mode<synchronous>, transform_indices = @transform_5, window_bounds = array<i64: 32, 1>}, {transform_indices = @transform_6, window_bounds = array<i64: 32, 128>}]} {
    %c0 = arith.constant 0 : index
    %c0_0 = arith.constant 0 : index
    %c0_1 = arith.constant 0 : index
    %0 = vector.load %arg1[%c0, %c0_0, %c0_1] : memref<8x4x128xf32, #tpu.memory_space<vmem>>, vector<8x4x128xf32>
    %c0_2 = arith.constant 0 : index
    %c0_3 = arith.constant 0 : index
    %1 = vector.load %arg2[%c0_2, %c0_3] : memref<4x128xf32, #tpu.memory_space<vmem>>, vector<4x128xf32>
    %2 = vector.extract_strided_slice %1 {offsets = [2, 0], sizes = [1, 128], strides = [1, 1]} : vector<4x128xf32> to vector<1x128xf32>
    %c0_4 = arith.constant 0 : index
    %c0_5 = arith.constant 0 : index
    %3 = vector.load %arg3[%c0_4, %c0_5] : memref<32x4xf32, #tpu.memory_space<vmem>>, vector<32x4xf32>
    %cst = arith.constant dense<0.000000e+00> : vector<4x128xf32>
    %4 = vector.multi_reduction <add>, %0, %cst [0] : vector<8x4x128xf32> to vector<4x128xf32>
    %cst_6 = arith.constant 1.000000e+00 : f32
    %5 = vector.broadcast %cst_6 : f32 to vector<1x128xf32>
    %6 = arith.maximumf %2, %5 : vector<1x128xf32>
    %7 = tpu.reciprocal %6 {approx = true} : vector<1x128xf32> -> vector<1x128xf32>
    %8 = vector.broadcast %7 : vector<1x128xf32> to vector<4x128xf32>
    %9 = arith.mulf %4, %8 : vector<4x128xf32>
    %c0_7 = arith.constant 0 : index
    %c0_8 = arith.constant 0 : index
    %10 = vector.load %arg4[%c0_7, %c0_8] : memref<32x4xf32, #tpu.memory_space<vmem>>, vector<32x4xf32>
    %cst_9 = arith.constant dense<0.000000e+00> : vector<32x128xf32>
    %11 = tpu.matmul %10, %1, %cst_9 {dimension_numbers = #tpu.dot_dimension_numbers<[1], [0], [0], [1], [0, 0, 1, 1], [], []>} : vector<32x4xf32>, vector<4x128xf32>, vector<32x128xf32> -> vector<32x128xf32>
    %c0_10 = arith.constant 0 : index
    %c0_11 = arith.constant 0 : index
    %12 = vector.load %arg5[%c0_10, %c0_11] : memref<32x4xf32, #tpu.memory_space<vmem>>, vector<32x4xf32>
    %cst_12 = arith.constant dense<0.000000e+00> : vector<32x128xf32>
    %13 = tpu.matmul %12, %9, %cst_12 {dimension_numbers = #tpu.dot_dimension_numbers<[1], [0], [0], [1], [0, 0, 1, 1], [], []>} : vector<32x4xf32>, vector<4x128xf32>, vector<32x128xf32> -> vector<32x128xf32>
    %14 = arith.addf %11, %13 : vector<32x128xf32>
    %15 = vector.extract_strided_slice %0 {offsets = [0, 0, 0], sizes = [1, 4, 128], strides = [1, 1, 1]} : vector<8x4x128xf32> to vector<1x4x128xf32>
    %16 = vector.shape_cast %15 : vector<1x4x128xf32> to vector<4x128xf32>
    %cst_13 = arith.constant dense<0.000000e+00> : vector<32x128xf32>
    %17 = tpu.matmul %3, %16, %cst_13 {dimension_numbers = #tpu.dot_dimension_numbers<[1], [0], [0], [1], [0, 0, 1, 1], [], []>} : vector<32x4xf32>, vector<4x128xf32>, vector<32x128xf32> -> vector<32x128xf32>
    %18 = arith.subf %17, %14 : vector<32x128xf32>
    %cst_14 = arith.constant 0.000000e+00 : f32
    %19 = vector.broadcast %cst_14 : f32 to vector<1x128xf32>
    %20 = arith.cmpf olt, %19, %2 : vector<1x128xf32>
    %cst_15 = arith.constant 0.000000e+00 : f32
    %21 = vector.shape_cast %20 : vector<1x128xi1> to vector<1x128xi1>
    %22 = vector.broadcast %21 : vector<1x128xi1> to vector<32x128xi1>
    %23 = vector.broadcast %cst_15 : f32 to vector<32x128xf32>
    %24 = arith.select %22, %18, %23 : vector<32x128xi1>, vector<32x128xf32>
    %25 = vector.extract_strided_slice %0 {offsets = [1, 0, 0], sizes = [1, 4, 128], strides = [1, 1, 1]} : vector<8x4x128xf32> to vector<1x4x128xf32>
    %26 = vector.shape_cast %25 : vector<1x4x128xf32> to vector<4x128xf32>
    %cst_16 = arith.constant dense<0.000000e+00> : vector<32x128xf32>
    %27 = tpu.matmul %3, %26, %cst_16 {dimension_numbers = #tpu.dot_dimension_numbers<[1], [0], [0], [1], [0, 0, 1, 1], [], []>} : vector<32x4xf32>, vector<4x128xf32>, vector<32x128xf32> -> vector<32x128xf32>
    %28 = arith.subf %27, %14 : vector<32x128xf32>
    %cst_17 = arith.constant 1.000000e+00 : f32
    %29 = vector.broadcast %cst_17 : f32 to vector<1x128xf32>
    %30 = arith.cmpf olt, %29, %2 : vector<1x128xf32>
    %cst_18 = arith.constant 0.000000e+00 : f32
    %31 = vector.shape_cast %30 : vector<1x128xi1> to vector<1x128xi1>
    %32 = vector.broadcast %31 : vector<1x128xi1> to vector<32x128xi1>
    %33 = vector.broadcast %cst_18 : f32 to vector<32x128xf32>
    %34 = arith.select %32, %28, %33 : vector<32x128xi1>, vector<32x128xf32>
    %35 = arith.maximumf %24, %34 : vector<32x128xf32>
    %36 = vector.extract_strided_slice %0 {offsets = [2, 0, 0], sizes = [1, 4, 128], strides = [1, 1, 1]} : vector<8x4x128xf32> to vector<1x4x128xf32>
    %37 = vector.shape_cast %36 : vector<1x4x128xf32> to vector<4x128xf32>
    %cst_19 = arith.constant dense<0.000000e+00> : vector<32x128xf32>
    %38 = tpu.matmul %3, %37, %cst_19 {dimension_numbers = #tpu.dot_dimension_numbers<[1], [0], [0], [1], [0, 0, 1, 1], [], []>} : vector<32x4xf32>, vector<4x128xf32>, vector<32x128xf32> -> vector<32x128xf32>
    %39 = arith.subf %38, %14 : vector<32x128xf32>
    %cst_20 = arith.constant 2.000000e+00 : f32
    %40 = vector.broadcast %cst_20 : f32 to vector<1x128xf32>
    %41 = arith.cmpf olt, %40, %2 : vector<1x128xf32>
    %cst_21 = arith.constant 0.000000e+00 : f32
    %42 = vector.shape_cast %41 : vector<1x128xi1> to vector<1x128xi1>
    %43 = vector.broadcast %42 : vector<1x128xi1> to vector<32x128xi1>
    %44 = vector.broadcast %cst_21 : f32 to vector<32x128xf32>
    %45 = arith.select %43, %39, %44 : vector<32x128xi1>, vector<32x128xf32>
    %46 = arith.maximumf %35, %45 : vector<32x128xf32>
    %47 = vector.extract_strided_slice %0 {offsets = [3, 0, 0], sizes = [1, 4, 128], strides = [1, 1, 1]} : vector<8x4x128xf32> to vector<1x4x128xf32>
    %48 = vector.shape_cast %47 : vector<1x4x128xf32> to vector<4x128xf32>
    %cst_22 = arith.constant dense<0.000000e+00> : vector<32x128xf32>
    %49 = tpu.matmul %3, %48, %cst_22 {dimension_numbers = #tpu.dot_dimension_numbers<[1], [0], [0], [1], [0, 0, 1, 1], [], []>} : vector<32x4xf32>, vector<4x128xf32>, vector<32x128xf32> -> vector<32x128xf32>
    %50 = arith.subf %49, %14 : vector<32x128xf32>
    %cst_23 = arith.constant 3.000000e+00 : f32
    %51 = vector.broadcast %cst_23 : f32 to vector<1x128xf32>
    %52 = arith.cmpf olt, %51, %2 : vector<1x128xf32>
    %cst_24 = arith.constant 0.000000e+00 : f32
    %53 = vector.shape_cast %52 : vector<1x128xi1> to vector<1x128xi1>
    %54 = vector.broadcast %53 : vector<1x128xi1> to vector<32x128xi1>
    %55 = vector.broadcast %cst_24 : f32 to vector<32x128xf32>
    %56 = arith.select %54, %50, %55 : vector<32x128xi1>, vector<32x128xf32>
    %57 = arith.maximumf %46, %56 : vector<32x128xf32>
    %58 = vector.extract_strided_slice %0 {offsets = [4, 0, 0], sizes = [1, 4, 128], strides = [1, 1, 1]} : vector<8x4x128xf32> to vector<1x4x128xf32>
    %59 = vector.shape_cast %58 : vector<1x4x128xf32> to vector<4x128xf32>
    %cst_25 = arith.constant dense<0.000000e+00> : vector<32x128xf32>
    %60 = tpu.matmul %3, %59, %cst_25 {dimension_numbers = #tpu.dot_dimension_numbers<[1], [0], [0], [1], [0, 0, 1, 1], [], []>} : vector<32x4xf32>, vector<4x128xf32>, vector<32x128xf32> -> vector<32x128xf32>
    %61 = arith.subf %60, %14 : vector<32x128xf32>
    %cst_26 = arith.constant 4.000000e+00 : f32
    %62 = vector.broadcast %cst_26 : f32 to vector<1x128xf32>
    %63 = arith.cmpf olt, %62, %2 : vector<1x128xf32>
    %cst_27 = arith.constant 0.000000e+00 : f32
    %64 = vector.shape_cast %63 : vector<1x128xi1> to vector<1x128xi1>
    %65 = vector.broadcast %64 : vector<1x128xi1> to vector<32x128xi1>
    %66 = vector.broadcast %cst_27 : f32 to vector<32x128xf32>
    %67 = arith.select %65, %61, %66 : vector<32x128xi1>, vector<32x128xf32>
    %68 = arith.maximumf %57, %67 : vector<32x128xf32>
    %69 = vector.extract_strided_slice %0 {offsets = [5, 0, 0], sizes = [1, 4, 128], strides = [1, 1, 1]} : vector<8x4x128xf32> to vector<1x4x128xf32>
    %70 = vector.shape_cast %69 : vector<1x4x128xf32> to vector<4x128xf32>
    %cst_28 = arith.constant dense<0.000000e+00> : vector<32x128xf32>
    %71 = tpu.matmul %3, %70, %cst_28 {dimension_numbers = #tpu.dot_dimension_numbers<[1], [0], [0], [1], [0, 0, 1, 1], [], []>} : vector<32x4xf32>, vector<4x128xf32>, vector<32x128xf32> -> vector<32x128xf32>
    %72 = arith.subf %71, %14 : vector<32x128xf32>
    %cst_29 = arith.constant 5.000000e+00 : f32
    %73 = vector.broadcast %cst_29 : f32 to vector<1x128xf32>
    %74 = arith.cmpf olt, %73, %2 : vector<1x128xf32>
    %cst_30 = arith.constant 0.000000e+00 : f32
    %75 = vector.shape_cast %74 : vector<1x128xi1> to vector<1x128xi1>
    %76 = vector.broadcast %75 : vector<1x128xi1> to vector<32x128xi1>
    %77 = vector.broadcast %cst_30 : f32 to vector<32x128xf32>
    %78 = arith.select %76, %72, %77 : vector<32x128xi1>, vector<32x128xf32>
    %79 = arith.maximumf %68, %78 : vector<32x128xf32>
    %80 = vector.extract_strided_slice %0 {offsets = [6, 0, 0], sizes = [1, 4, 128], strides = [1, 1, 1]} : vector<8x4x128xf32> to vector<1x4x128xf32>
    %81 = vector.shape_cast %80 : vector<1x4x128xf32> to vector<4x128xf32>
    %cst_31 = arith.constant dense<0.000000e+00> : vector<32x128xf32>
    %82 = tpu.matmul %3, %81, %cst_31 {dimension_numbers = #tpu.dot_dimension_numbers<[1], [0], [0], [1], [0, 0, 1, 1], [], []>} : vector<32x4xf32>, vector<4x128xf32>, vector<32x128xf32> -> vector<32x128xf32>
    %83 = arith.subf %82, %14 : vector<32x128xf32>
    %cst_32 = arith.constant 6.000000e+00 : f32
    %84 = vector.broadcast %cst_32 : f32 to vector<1x128xf32>
    %85 = arith.cmpf olt, %84, %2 : vector<1x128xf32>
    %cst_33 = arith.constant 0.000000e+00 : f32
    %86 = vector.shape_cast %85 : vector<1x128xi1> to vector<1x128xi1>
    %87 = vector.broadcast %86 : vector<1x128xi1> to vector<32x128xi1>
    %88 = vector.broadcast %cst_33 : f32 to vector<32x128xf32>
    %89 = arith.select %87, %83, %88 : vector<32x128xi1>, vector<32x128xf32>
    %90 = arith.maximumf %79, %89 : vector<32x128xf32>
    %91 = vector.extract_strided_slice %0 {offsets = [7, 0, 0], sizes = [1, 4, 128], strides = [1, 1, 1]} : vector<8x4x128xf32> to vector<1x4x128xf32>
    %92 = vector.shape_cast %91 : vector<1x4x128xf32> to vector<4x128xf32>
    %cst_34 = arith.constant dense<0.000000e+00> : vector<32x128xf32>
    %93 = tpu.matmul %3, %92, %cst_34 {dimension_numbers = #tpu.dot_dimension_numbers<[1], [0], [0], [1], [0, 0, 1, 1], [], []>} : vector<32x4xf32>, vector<4x128xf32>, vector<32x128xf32> -> vector<32x128xf32>
    %94 = arith.subf %93, %14 : vector<32x128xf32>
    %cst_35 = arith.constant 7.000000e+00 : f32
    %95 = vector.broadcast %cst_35 : f32 to vector<1x128xf32>
    %96 = arith.cmpf olt, %95, %2 : vector<1x128xf32>
    %cst_36 = arith.constant 0.000000e+00 : f32
    %97 = vector.shape_cast %96 : vector<1x128xi1> to vector<1x128xi1>
    %98 = vector.broadcast %97 : vector<1x128xi1> to vector<32x128xi1>
    %99 = vector.broadcast %cst_36 : f32 to vector<32x128xf32>
    %100 = arith.select %98, %94, %99 : vector<32x128xi1>, vector<32x128xf32>
    %101 = arith.maximumf %90, %100 : vector<32x128xf32>
    %c0_37 = arith.constant 0 : index
    %c0_38 = arith.constant 0 : index
    %102 = vector.load %arg6[%c0_37, %c0_38] : memref<32x1xf32, #tpu.memory_space<vmem>>, vector<32x1xf32>
    %103 = vector.broadcast %102 : vector<32x1xf32> to vector<32x128xf32>
    %104 = arith.addf %101, %103 : vector<32x128xf32>
    %cst_39 = arith.constant 0.000000e+00 : f32
    %105 = vector.broadcast %cst_39 : f32 to vector<32x128xf32>
    %106 = arith.maximumf %104, %105 : vector<32x128xf32>
    %c0_40 = arith.constant 0 : index
    %c0_41 = arith.constant 0 : index
    %107 = vector.load %arg7[%c0_40, %c0_41] : memref<32x128xf32, #tpu.memory_space<vmem>>, vector<32x128xf32>
    tpu.vector_store %arg7[%c0_40, %c0_41], %106 {strides = array<i32>} : memref<32x128xf32, #tpu.memory_space<vmem>>, vector<32x128xf32>,
    return
  }
  func.func @transform_0(%arg0: i32) -> (i32, i32, i32) {
    %c0_i32 = arith.constant 0 : i32
    %c0_i32_0 = arith.constant 0 : i32
    %c0_i32_1 = arith.constant 0 : i32
    return %c0_i32, %c0_i32_0, %arg0 : i32, i32, i32
  }
  func.func @transform_1(%arg0: i32) -> (i32, i32) {
    %c0_i32 = arith.constant 0 : i32
    %c0_i32_0 = arith.constant 0 : i32
    return %c0_i32, %arg0 : i32, i32
  }
  func.func @transform_2(%arg0: i32) -> (i32, i32) {
    %c0_i32 = arith.constant 0 : i32
    %c0_i32_0 = arith.constant 0 : i32
    %c0_i32_1 = arith.constant 0 : i32
    return %c0_i32, %c0_i32_0 : i32, i32
  }
  func.func @transform_3(%arg0: i32) -> (i32, i32) {
    %c0_i32 = arith.constant 0 : i32
    %c0_i32_0 = arith.constant 0 : i32
    %c0_i32_1 = arith.constant 0 : i32
    return %c0_i32, %c0_i32_0 : i32, i32
  }
  func.func @transform_4(%arg0: i32) -> (i32, i32) {
    %c0_i32 = arith.constant 0 : i32
    %c0_i32_0 = arith.constant 0 : i32
    %c0_i32_1 = arith.constant 0 : i32
    return %c0_i32, %c0_i32_0 : i32, i32
  }
  func.func @transform_5(%arg0: i32) -> (i32, i32) {
    %c0_i32 = arith.constant 0 : i32
    %c0_i32_0 = arith.constant 0 : i32
    %c0_i32_1 = arith.constant 0 : i32
    return %c0_i32, %c0_i32_0 : i32, i32
  }
  func.func @transform_6(%arg0: i32) -> (i32, i32) {
    %c0_i32 = arith.constant 0 : i32
    %c0_i32_0 = arith.constant 0 : i32
    return %c0_i32, %arg0 : i32, i32
  }
}

</mosaic_0001>

<llo_original>
// kernel: tpu_custom_call.1
$region0: #{tpu_custom_call.1}
  #allocation0 [shape = 'u32[]', space=smem, size = 0x4, offset = 0x4, fixed_abs, tag = 'smem constant byte address 0x4 - core index']
  #allocation1 [shape = 'u32[144,128]{1,0:T(1,128)}', space=vmem, size = 0x12000, scoped, tag = 'internal scratch']
  %s0 = inlined_call_operand.vmem [shape: f32[8,4,128], index: 0, kind: input, shape index: {}]
  %s1 = inlined_call_operand.vmem [shape: f32[4,128], index: 1, kind: input, shape index: {}]
  %s2 = inlined_call_operand.vmem [shape: f32[32,4], index: 2, kind: input, shape index: {}]
  %s3 = inlined_call_operand.vmem [shape: f32[32,4], index: 3, kind: input, shape index: {}]
  %s4 = inlined_call_operand.vmem [shape: f32[32,4], index: 4, kind: input, shape index: {}]
  %s5 = inlined_call_operand.vmem [shape: f32[32,1], index: 5, kind: input, shape index: {}]
  %s6 = inlined_call_operand.hbm [shape: f32[32,128], index: 6, kind: output, shape index: {}]
  %s7 = sld [smem:[#allocation0]]
  $region34: #{tpu_custom_call.1} parent=0
    _
  %s9 = ssub.s32 1, %s7
  %s10 = scalar_select 0, %s9, %s7
  $region1: #{tpu_custom_call.1} parent=0
    #allocation2 [shape = 'u8[16384]{0}', space=vmem, size = 0x4000, scoped, tag = 'output window, operand 0, single buffered']
    #allocation3 [shape = 's32[1]{0}', space=sflag, size = 0x4, scoped, tag = 'scoped memory for tpu_custom_call.1']
    %11 = vsyncpa [#allocation3], 0
    // Predicated region
    $region2: #{tpu_custom_call.1} parent=1 // pred_check
      _
    $region3: #{tpu_custom_call.1} parent=1 // pred_check_branch
      %13 = sbr.rel (0) target = $region5
    $region4: #{tpu_custom_call.1} parent=1 // pred_region
      _
    $region5: #{tpu_custom_call.1} parent=1 // pred_fallthru
      _
    // Predicated region
    $region6: #{tpu_custom_call.1} parent=1 // pred_check
      _
    $region7: #{tpu_custom_call.1} parent=1 // pred_check_branch
      %15 = sbr.rel (0) target = $region9
    $region8: #{tpu_custom_call.1} parent=1 // pred_region
      _
    $region9: #{tpu_custom_call.1} parent=1 // pred_fallthru
      _
    // Predicated region
    $region10: #{tpu_custom_call.1} parent=1 // pred_check
      _
    $region11: #{tpu_custom_call.1} parent=1 // pred_check_branch
      %17 = sbr.rel (0) target = $region13
    $region12: #{tpu_custom_call.1} parent=1 // pred_region
      _
    $region13: #{tpu_custom_call.1} parent=1 // pred_fallthru
      _
    // Predicated region
    $region14: #{tpu_custom_call.1} parent=1 // pred_check
      _
    $region15: #{tpu_custom_call.1} parent=1 // pred_check_branch
      %19 = sbr.rel (0) target = $region17
    $region16: #{tpu_custom_call.1} parent=1 // pred_region
      _
    $region17: #{tpu_custom_call.1} parent=1 // pred_fallthru
      _
    // Predicated region
    $region18: #{tpu_custom_call.1} parent=1 // pred_check
      _
    $region19: #{tpu_custom_call.1} parent=1 // pred_check_branch
      %21 = sbr.rel (0) target = $region21
    $region20: #{tpu_custom_call.1} parent=1 // pred_region
      _
    $region21: #{tpu_custom_call.1} parent=1 // pred_fallthru
      _
    // Predicated region
    $region22: #{tpu_custom_call.1} parent=1 // pred_check
      _
    $region23: #{tpu_custom_call.1} parent=1 // pred_check_branch
      %23 = sbr.rel (0) target = $region25
    $region24: #{tpu_custom_call.1} parent=1 // pred_region
      _
    $region25: #{tpu_custom_call.1} parent=1 // pred_fallthru
      _
    %v24 = vld [vmem:[%s0] sm:$0xf]
    %v25 = vld [vmem:[%s0 + $0x4] sm:$0xf]
    %v26 = vld [vmem:[%s0 + $0x8] sm:$0xf]
    %v27 = vld [vmem:[%s0 + $0xc] sm:$0xf]
    %v28 = vld [vmem:[%s0 + $0x10] sm:$0xf]
    %v29 = vld [vmem:[%s0 + $0x14] sm:$0xf]
    %v30 = vld [vmem:[%s0 + $0x18] sm:$0xf]
    %v31 = vld [vmem:[%s0 + $0x1c] sm:$0xf]
    %v32 = vld [vmem:[%s1] sm:$0xf]
    %v33 = vld [vmem:[%s2] sm:$0xff]
    %v34 = vld [vmem:[%s2 + $0x8] sm:$0xff]
    %v35 = vld [vmem:[%s2 + $0x10] sm:$0xff]
    %v36 = vld [vmem:[%s2 + $0x18] sm:$0xff]
    %vm37 = vcmask 1043456
    %v38 = vsel %vm37, %v24, 0.0
    %v39 = vsel %vm37, %v25, 0.0
    %v40 = vadd.f32 %v38, %v39
    %v41 = vsel %vm37, %v26, 0.0
    %v42 = vadd.f32 %v40, %v41
    %v43 = vsel %vm37, %v27, 0.0
    %v44 = vadd.f32 %v42, %v43
    %v45 = vsel %vm37, %v28, 0.0
    %v46 = vadd.f32 %v44, %v45
    %v47 = vsel %vm37, %v29, 0.0
    %v48 = vadd.f32 %v46, %v47
    %v49 = vsel %vm37, %v30, 0.0
    %v50 = vadd.f32 %v48, %v49
    %v51 = vsel %vm37, %v31, 0.0
    %v52 = vadd.f32 %v50, %v51
    %v53 = vmax.f32 %v32, 1.0
    %v54 = vrcp.pop %v53
    %v55 = vlaneseq
    %v56 = vshrl.u32 %v55, 7
    %v57 = vsub.s32 2, %v56
    %v58 = vrot.slane %v54, %v57
    %v59 = vmul.f32 %v52, %v58
    %v60 = vld [vmem:[%s3] sm:$0xff]
    %v61 = vld [vmem:[%s3 + $0x8] sm:$0xff]
    %v62 = vld [vmem:[%s3 + $0x10] sm:$0xff]
    %v63 = vld [vmem:[%s3 + $0x18] sm:$0xff]
    %v64 = vld [vmem:[%s4] sm:$0xff]
    %v65 = vld [vmem:[%s4 + $0x8] sm:$0xff]
    %v66 = vld [vmem:[%s4 + $0x10] sm:$0xff]
    %v67 = vld [vmem:[%s4 + $0x18] sm:$0xff]
    %vm68 = vcmask 31744
    %v70 = vsel %vm68, %v64, 0
    %v73 = vsel %vm68, %v65, 0
    %v76 = vsel %vm68, %v66, 0
    %v79 = vsel %vm68, %v67, 0
    %v82 = vsel %vm37, %v59, 0
    %84 = vmatprep.subr.mxu0 0.0
    %85 = vmatpush1.msra.mxu0 %v82
    %86 = vmatprep.subr.mxu0 0.0
    %87 = vmatpush1.msra.mxu0 0.0
    %88 = vmatprep.subr.mxu0 0.0
    %89 = vmatpush1.msra.mxu0 0.0
    %90 = vmatprep.subr.mxu0 0.0
    %91 = vmatpush1.msra.mxu0 0.0
    %92 = vmatprep.subr.mxu0 0.0
    %93 = vmatpush1.msra.mxu0 0.0
    %94 = vmatprep.subr.mxu0 0.0
    %95 = vmatpush1.msra.mxu0 0.0
    %96 = vmatprep.subr.mxu0 0.0
    %97 = vmatpush1.msra.mxu0 0.0
    %98 = vmatprep.subr.mxu0 0.0
    %99 = vmatpush1.msra.mxu0 0.0
    %100 = vmatprep.subr.mxu0 0.0
    %101 = vmatpush1.msra.mxu0 0.0
    %102 = vmatprep.subr.mxu0 0.0
    %103 = vmatpush1.msra.mxu0 0.0
    %104 = vmatprep.subr.mxu0 0.0
    %105 = vmatpush1.msra.mxu0 0.0
    %106 = vmatprep.subr.mxu0 0.0
    %107 = vmatpush1.msra.mxu0 0.0
    %108 = vmatprep.subr.mxu0 0.0
    %109 = vmatpush1.msra.mxu0 0.0
    %110 = vmatprep.subr.mxu0 0.0
    %111 = vmatpush1.msra.mxu0 0.0
    %112 = vmatprep.subr.mxu0 0.0
    %113 = vmatpush1.msra.mxu0 0.0
    %114 = vmatprep.subr.mxu0 0.0
    %115 = vmatpush1.msra.mxu0 0.0
    %116 = vmatprep.subr.mxu0 0.0
    %117 = vmatpush1.msra.mxu0 0.0
    %118 = vmatprep.subr.mxu0 0.0
    %119 = vmatpush1.msra.mxu0 0.0
    %120 = vmatprep.subr.mxu0 0.0
    %121 = vmatpush1.msra.mxu0 0.0
    %122 = vmatprep.subr.mxu0 0.0
    %123 = vmatpush1.msra.mxu0 0.0
    %124 = vmatprep.subr.mxu0 0.0
    %125 = vmatpush1.msra.mxu0 0.0
    %126 = vmatprep.subr.mxu0 0.0
    %127 = vmatpush1.msra.mxu0 0.0
    %128 = vmatprep.subr.mxu0 0.0
    %129 = vmatpush1.msra.mxu0 0.0
    %130 = vmatprep.subr.mxu0 0.0
    %131 = vmatpush1.msra.mxu0 0.0
    %132 = vmatprep.subr.mxu0 0.0
    %133 = vmatpush1.msra.mxu0 0.0
    %134 = vmatprep.subr.mxu0 0.0
    %135 = vmatpush1.msra.mxu0 0.0
    %136 = vmatprep.subr.mxu0 0.0
    %137 = vmatpush1.msra.mxu0 0.0
    %138 = vmatprep.subr.mxu0 0.0
    %139 = vmatpush1.msra.mxu0 0.0
    %140 = vmatprep.subr.mxu0 0.0
    %141 = vmatpush1.msra.mxu0 0.0
    %142 = vmatprep.subr.mxu0 0.0
    %143 = vmatpush1.msra.mxu0 0.0
    %144 = vmatprep.subr.mxu0 0.0
    %145 = vmatpush1.msra.mxu0 0.0
    %146 = vmatprep.subr.mxu0 0.0
    %147 = vmatpush1.msra.mxu0 0.0
    %148 = vmatprep.mubr.f32.mxu0 0.0
    %149 = vmatmul.mubr.f32.gmra.mrb[0].mxu0 %v70
    %v150 = vpop.f32.mrb[0].mxu0
    %v151 = vadd.f32 0.0, %v150
    %v152 = vpop.f32.mrb[0].mxu0
    %153 = vmatprep.mubr.f32.mxu0 0.0
    %154 = vmatmul.mubr.f32.gmra.mrb[0].mxu0 %v73
    %v155 = vpop.f32.mrb[0].mxu0
    %v156 = vadd.f32 0.0, %v155
    %v157 = vpop.f32.mrb[0].mxu0
    %158 = vmatprep.mubr.f32.mxu0 0.0
    %159 = vmatmul.mubr.f32.gmra.mrb[0].mxu0 %v76
    %v160 = vpop.f32.mrb[0].mxu0
    %v161 = vadd.f32 0.0, %v160
    %v162 = vpop.f32.mrb[0].mxu0
    %163 = vmatprep.mubr.f32.mxu0 0.0
    %164 = vmatmul.mubr.f32.gmra.mrb[0].mxu0 %v79
    %v165 = vpop.f32.mrb[0].mxu0
    %v166 = vadd.f32 0.0, %v165
    %v167 = vpop.f32.mrb[0].mxu0
    %168 = vdwg.mxu0
    %v170 = vsel %vm68, %v60, 0
    %v173 = vsel %vm68, %v61, 0
    %v176 = vsel %vm68, %v62, 0
    %v179 = vsel %vm68, %v63, 0
    %v182 = vsel %vm37, %v32, 0
    %184 = vmatprep.subr.mxu0 0.0
    %185 = vmatpush1.msra.mxu0 %v182
    %186 = vmatprep.subr.mxu0 0.0
    %187 = vmatpush1.msra.mxu0 0.0
    %188 = vmatprep.subr.mxu0 0.0
    %189 = vmatpush1.msra.mxu0 0.0
    %190 = vmatprep.subr.mxu0 0.0
    %191 = vmatpush1.msra.mxu0 0.0
    %192 = vmatprep.subr.mxu0 0.0
    %193 = vmatpush1.msra.mxu0 0.0
    %194 = vmatprep.subr.mxu0 0.0
    %195 = vmatpush1.msra.mxu0 0.0
    %196 = vmatprep.subr.mxu0 0.0
    %197 = vmatpush1.msra.mxu0 0.0
    %198 = vmatprep.subr.mxu0 0.0
    %199 = vmatpush1.msra.mxu0 0.0
    %200 = vmatprep.subr.mxu0 0.0
    %201 = vmatpush1.msra.mxu0 0.0
    %202 = vmatprep.subr.mxu0 0.0
    %203 = vmatpush1.msra.mxu0 0.0
    %204 = vmatprep.subr.mxu0 0.0
    %205 = vmatpush1.msra.mxu0 0.0
    %206 = vmatprep.subr.mxu0 0.0
    %207 = vmatpush1.msra.mxu0 0.0
    %208 = vmatprep.subr.mxu0 0.0
    %209 = vmatpush1.msra.mxu0 0.0
    %210 = vmatprep.subr.mxu0 0.0
    %211 = vmatpush1.msra.mxu0 0.0
    %212 = vmatprep.subr.mxu0 0.0
    %213 = vmatpush1.msra.mxu0 0.0
    %214 = vmatprep.subr.mxu0 0.0
    %215 = vmatpush1.msra.mxu0 0.0
    %216 = vmatprep.subr.mxu0 0.0
    %217 = vmatpush1.msra.mxu0 0.0
    %218 = vmatprep.subr.mxu0 0.0
    %219 = vmatpush1.msra.mxu0 0.0
    %220 = vmatprep.subr.mxu0 0.0
    %221 = vmatpush1.msra.mxu0 0.0
    %222 = vmatprep.subr.mxu0 0.0
    %223 = vmatpush1.msra.mxu0 0.0
    %224 = vmatprep.subr.mxu0 0.0
    %225 = vmatpush1.msra.mxu0 0.0
    %226 = vmatprep.subr.mxu0 0.0
    %227 = vmatpush1.msra.mxu0 0.0
    %228 = vmatprep.subr.mxu0 0.0
    %229 = vmatpush1.msra.mxu0 0.0
    %230 = vmatprep.subr.mxu0 0.0
    %231 = vmatpush1.msra.mxu0 0.0
    %232 = vmatprep.subr.mxu0 0.0
    %233 = vmatpush1.msra.mxu0 0.0
    %234 = vmatprep.subr.mxu0 0.0
    %235 = vmatpush1.msra.mxu0 0.0
    %236 = vmatprep.subr.mxu0 0.0
    %237 = vmatpush1.msra.mxu0 0.0
    %238 = vmatprep.subr.mxu0 0.0
    %239 = vmatpush1.msra.mxu0 0.0
    %240 = vmatprep.subr.mxu0 0.0
    %241 = vmatpush1.msra.mxu0 0.0
    %242 = vmatprep.subr.mxu0 0.0
    %243 = vmatpush1.msra.mxu0 0.0
    %244 = vmatprep.subr.mxu0 0.0
    %245 = vmatpush1.msra.mxu0 0.0
    %246 = vmatprep.subr.mxu0 0.0
    %247 = vmatpush1.msra.mxu0 0.0
    %248 = vmatprep.mubr.f32.mxu0 0.0
    %249 = vmatmul.mubr.f32.gmra.mrb[0].mxu0 %v170
    %v250 = vpop.f32.mrb[0].mxu0
    %v251 = vadd.f32 %v151, %v250
    %v252 = vpop.f32.mrb[0].mxu0
    %253 = vmatprep.mubr.f32.mxu0 0.0
    %254 = vmatmul.mubr.f32.gmra.mrb[0].mxu0 %v173
    %v255 = vpop.f32.mrb[0].mxu0
    %v256 = vadd.f32 %v156, %v255
    %v257 = vpop.f32.mrb[0].mxu0
    %258 = vmatprep.mubr.f32.mxu0 0.0
    %259 = vmatmul.mubr.f32.gmra.mrb[0].mxu0 %v176
    %v260 = vpop.f32.mrb[0].mxu0
    %v261 = vadd.f32 %v161, %v260
    %v262 = vpop.f32.mrb[0].mxu0
    %263 = vmatprep.mubr.f32.mxu0 0.0
    %264 = vmatmul.mubr.f32.gmra.mrb[0].mxu0 %v179
    %v265 = vpop.f32.mrb[0].mxu0
    %v266 = vadd.f32 %v166, %v265
    %v267 = vpop.f32.mrb[0].mxu0
    %268 = vdwg.mxu0
    %v270 = vsel %vm68, %v33, 0
    %v273 = vsel %vm68, %v34, 0
    %v276 = vsel %vm68, %v35, 0
    %v279 = vsel %vm68, %v36, 0
    %v282 = vsel %vm37, %v24, 0
    %284 = vmatprep.subr.mxu0 0.0
    %285 = vmatpush1.msra.mxu0 %v282
    %286 = vmatprep.subr.mxu0 0.0
    %287 = vmatpush1.msra.mxu0 0.0
    %288 = vmatprep.subr.mxu0 0.0
    %289 = vmatpush1.msra.mxu0 0.0
    %290 = vmatprep.subr.mxu0 0.0
    %291 = vmatpush1.msra.mxu0 0.0
    %292 = vmatprep.subr.mxu0 0.0
    %293 = vmatpush1.msra.mxu0 0.0
    %294 = vmatprep.subr.mxu0 0.0
    %295 = vmatpush1.msra.mxu0 0.0
    %296 = vmatprep.subr.mxu0 0.0
    %297 = vmatpush1.msra.mxu0 0.0
    %298 = vmatprep.subr.mxu0 0.0
    %299 = vmatpush1.msra.mxu0 0.0
    %300 = vmatprep.subr.mxu0 0.0
    %301 = vmatpush1.msra.mxu0 0.0
    %302 = vmatprep.subr.mxu0 0.0
    %303 = vmatpush1.msra.mxu0 0.0
    %304 = vmatprep.subr.mxu0 0.0
    %305 = vmatpush1.msra.mxu0 0.0
    %306 = vmatprep.subr.mxu0 0.0
    %307 = vmatpush1.msra.mxu0 0.0
    %308 = vmatprep.subr.mxu0 0.0
    %309 = vmatpush1.msra.mxu0 0.0
    %310 = vmatprep.subr.mxu0 0.0
    %311 = vmatpush1.msra.mxu0 0.0
    %312 = vmatprep.subr.mxu0 0.0
    %313 = vmatpush1.msra.mxu0 0.0
    %314 = vmatprep.subr.mxu0 0.0
    %315 = vmatpush1.msra.mxu0 0.0
    %316 = vmatprep.subr.mxu0 0.0
    %317 = vmatpush1.msra.mxu0 0.0
    %318 = vmatprep.subr.mxu0 0.0
    %319 = vmatpush1.msra.mxu0 0.0
    %320 = vmatprep.subr.mxu0 0.0
    %321 = vmatpush1.msra.mxu0 0.0
    %322 = vmatprep.subr.mxu0 0.0
    %323 = vmatpush1.msra.mxu0 0.0
    %324 = vmatprep.subr.mxu0 0.0
    %325 = vmatpush1.msra.mxu0 0.0
    %326 = vmatprep.subr.mxu0 0.0
    %327 = vmatpush1.msra.mxu0 0.0
    %328 = vmatprep.subr.mxu0 0.0
    %329 = vmatpush1.msra.mxu0 0.0
    %330 = vmatprep.subr.mxu0 0.0
    %331 = vmatpush1.msra.mxu0 0.0
    %332 = vmatprep.subr.mxu0 0.0
    %333 = vmatpush1.msra.mxu0 0.0
    %334 = vmatprep.subr.mxu0 0.0
    %335 = vmatpush1.msra.mxu0 0.0
    %336 = vmatprep.subr.mxu0 0.0
    %337 = vmatpush1.msra.mxu0 0.0
    %338 = vmatprep.subr.mxu0 0.0
    %339 = vmatpush1.msra.mxu0 0.0
    %340 = vmatprep.subr.mxu0 0.0
    %341 = vmatpush1.msra.mxu0 0.0
    %342 = vmatprep.subr.mxu0 0.0
    %343 = vmatpush1.msra.mxu0 0.0
    %344 = vmatprep.subr.mxu0 0.0
    %345 = vmatpush1.msra.mxu0 0.0
    %346 = vmatprep.subr.mxu0 0.0
    %347 = vmatpush1.msra.mxu0 0.0
    %348 = vmatprep.mubr.f32.mxu0 0.0
    %349 = vmatmul.mubr.f32.gmra.mrb[0].mxu0 %v270
    %v350 = vpop.f32.mrb[0].mxu0
    %v351 = vadd.f32 0.0, %v350
    %v352 = vpop.f32.mrb[0].mxu0
    %353 = vmatprep.mubr.f32.mxu0 0.0
    %354 = vmatmul.mubr.f32.gmra.mrb[0].mxu0 %v273
    %v355 = vpop.f32.mrb[0].mxu0
    %v356 = vadd.f32 0.0, %v355
    %v357 = vpop.f32.mrb[0].mxu0
    %358 = vmatprep.mubr.f32.mxu0 0.0
    %359 = vmatmul.mubr.f32.gmra.mrb[0].mxu0 %v276
    %v360 = vpop.f32.mrb[0].mxu0
    %v361 = vadd.f32 0.0, %v360
    %v362 = vpop.f32.mrb[0].mxu0
    %363 = vmatprep.mubr.f32.mxu0 0.0
    %364 = vmatmul.mubr.f32.gmra.mrb[0].mxu0 %v279
    %v365 = vpop.f32.mrb[0].mxu0
    %v366 = vadd.f32 0.0, %v365
    %v367 = vpop.f32.mrb[0].mxu0
    %368 = vdwg.mxu0
    %v369 = vsub.f32 %v351, %v251
    %v370 = vsub.f32 %v356, %v256
    %v371 = vsub.f32 %v361, %v261
    %v372 = vsub.f32 %v366, %v266
    %vm373 = vcmp.lt.f32.partialorder 0.0, %v32
    %v374 = vsel %vm373, 1, 0
    %v375 = vlaneseq
    %v376 = vshrl.u32 %v375, 7
    %v377 = vsub.s32 2, %v376
    %v378 = vrot.slane %v374, %v377
    %vm379 = vcmp.eq.s32.totalorder %v378, 1
    %v380 = vsel %vm379, %v369, 0.0
    %v381 = vsel %vm379, %v370, 0.0
    %v382 = vsel %vm379, %v371, 0.0
    %v383 = vsel %vm379, %v372, 0.0
    %v385 = vsel %vm37, %v25, 0
    %387 = vmatprep.subr.mxu0 0.0
    %388 = vmatpush1.msra.mxu0 %v385
    %389 = vmatprep.subr.mxu0 0.0
    %390 = vmatpush1.msra.mxu0 0.0
    %391 = vmatprep.subr.mxu0 0.0
    %392 = vmatpush1.msra.mxu0 0.0
    %393 = vmatprep.subr.mxu0 0.0
    %394 = vmatpush1.msra.mxu0 0.0
    %395 = vmatprep.subr.mxu0 0.0
    %396 = vmatpush1.msra.mxu0 0.0
    %397 = vmatprep.subr.mxu0 0.0
    %398 = vmatpush1.msra.mxu0 0.0
    %399 = vmatprep.subr.mxu0 0.0
    %400 = vmatpush1.msra.mxu0 0.0
    %401 = vmatprep.subr.mxu0 0.0
    %402 = vmatpush1.msra.mxu0 0.0
    %403 = vmatprep.subr.mxu0 0.0
    %404 = vmatpush1.msra.mxu0 0.0
    %405 = vmatprep.subr.mxu0 0.0
    %406 = vmatpush1.msra.mxu0 0.0
    %407 = vmatprep.subr.mxu0 0.0
    %408 = vmatpush1.msra.mxu0 0.0
    %409 = vmatprep.subr.mxu0 0.0
    %410 = vmatpush1.msra.mxu0 0.0
    %411 = vmatprep.subr.mxu0 0.0
    %412 = vmatpush1.msra.mxu0 0.0
    %413 = vmatprep.subr.mxu0 0.0
    %414 = vmatpush1.msra.mxu0 0.0
    %415 = vmatprep.subr.mxu0 0.0
    %416 = vmatpush1.msra.mxu0 0.0
    %417 = vmatprep.subr.mxu0 0.0
    %418 = vmatpush1.msra.mxu0 0.0
    %419 = vmatprep.subr.mxu0 0.0
    %420 = vmatpush1.msra.mxu0 0.0
    %421 = vmatprep.subr.mxu0 0.0
    %422 = vmatpush1.msra.mxu0 0.0
    %423 = vmatprep.subr.mxu0 0.0
    %424 = vmatpush1.msra.mxu0 0.0
    %425 = vmatprep.subr.mxu0 0.0
    %426 = vmatpush1.msra.mxu0 0.0
    %427 = vmatprep.subr.mxu0 0.0
    %428 = vmatpush1.msra.mxu0 0.0
    %429 = vmatprep.subr.mxu0 0.0
    %430 = vmatpush1.msra.mxu0 0.0
    %431 = vmatprep.subr.mxu0 0.0
    %432 = vmatpush1.msra.mxu0 0.0
    %433 = vmatprep.subr.mxu0 0.0
    %434 = vmatpush1.msra.mxu0 0.0
    %435 = vmatprep.subr.mxu0 0.0
    %436 = vmatpush1.msra.mxu0 0.0
    %437 = vmatprep.subr.mxu0 0.0
    %438 = vmatpush1.msra.mxu0 0.0
    %439 = vmatprep.subr.mxu0 0.0
    %440 = vmatpush1.msra.mxu0 0.0
    %441 = vmatprep.subr.mxu0 0.0
    %442 = vmatpush1.msra.mxu0 0.0
    %443 = vmatprep.subr.mxu0 0.0
    %444 = vmatpush1.msra.mxu0 0.0
    %445 = vmatprep.subr.mxu0 0.0
    %446 = vmatpush1.msra.mxu0 0.0
    %447 = vmatprep.subr.mxu0 0.0
    %448 = vmatpush1.msra.mxu0 0.0
    %449 = vmatprep.subr.mxu0 0.0
    %450 = vmatpush1.msra.mxu0 0.0
    %451 = vmatprep.mubr.f32.mxu0 0.0
    %452 = vmatmul.mubr.f32.gmra.mrb[0].mxu0 %v270
    %v453 = vpop.f32.mrb[0].mxu0
    %v454 = vadd.f32 0.0, %v453
    %v455 = vpop.f32.mrb[0].mxu0
    %456 = vmatprep.mubr.f32.mxu0 0.0
    %457 = vmatmul.mubr.f32.gmra.mrb[0].mxu0 %v273
    %v458 = vpop.f32.mrb[0].mxu0
    %v459 = vadd.f32 0.0, %v458
    %v460 = vpop.f32.mrb[0].mxu0
    %461 = vmatprep.mubr.f32.mxu0 0.0
    %462 = vmatmul.mubr.f32.gmra.mrb[0].mxu0 %v276
    %v463 = vpop.f32.mrb[0].mxu0
    %v464 = vadd.f32 0.0, %v463
    %v465 = vpop.f32.mrb[0].mxu0
    %466 = vmatprep.mubr.f32.mxu0 0.0
    %467 = vmatmul.mubr.f32.gmra.mrb[0].mxu0 %v279
    %v468 = vpop.f32.mrb[0].mxu0
    %v469 = vadd.f32 0.0, %v468
    %v470 = vpop.f32.mrb[0].mxu0
    %471 = vdwg.mxu0
    %v472 = vsub.f32 %v454, %v251
    %v473 = vsub.f32 %v459, %v256
    %v474 = vsub.f32 %v464, %v261
    %v475 = vsub.f32 %v469, %v266
    %vm476 = vcmp.lt.f32.partialorder 1.0, %v32
    %v477 = vsel %vm476, 1, 0
    %v478 = vlaneseq
    %v479 = vshrl.u32 %v478, 7
    %v480 = vsub.s32 2, %v479
    %v481 = vrot.slane %v477, %v480
    %vm482 = vcmp.eq.s32.totalorder %v481, 1
    %v483 = vsel %vm482, %v472, 0.0
    %v484 = vsel %vm482, %v473, 0.0
    %v485 = vsel %vm482, %v474, 0.0
    %v486 = vsel %vm482, %v475, 0.0
    %v487 = vmax.f32 %v380, %v483
    %v488 = vmax.f32 %v381, %v484
    %v489 = vmax.f32 %v382, %v485
    %v490 = vmax.f32 %v383, %v486
    %v492 = vsel %vm37, %v26, 0
    %494 = vmatprep.subr.mxu0 0.0
    %495 = vmatpush1.msra.mxu0 %v492
    %496 = vmatprep.subr.mxu0 0.0
    %497 = vmatpush1.msra.mxu0 0.0
    %498 = vmatprep.subr.mxu0 0.0
    %499 = vmatpush1.msra.mxu0 0.0
    %500 = vmatprep.subr.mxu0 0.0
    %501 = vmatpush1.msra.mxu0 0.0
    %502 = vmatprep.subr.mxu0 0.0
    %503 = vmatpush1.msra.mxu0 0.0
    %504 = vmatprep.subr.mxu0 0.0
    %505 = vmatpush1.msra.mxu0 0.0
    %506 = vmatprep.subr.mxu0 0.0
    %507 = vmatpush1.msra.mxu0 0.0
    %508 = vmatprep.subr.mxu0 0.0
    %509 = vmatpush1.msra.mxu0 0.0
    %510 = vmatprep.subr.mxu0 0.0
    %511 = vmatpush1.msra.mxu0 0.0
    %512 = vmatprep.subr.mxu0 0.0
    %513 = vmatpush1.msra.mxu0 0.0
    %514 = vmatprep.subr.mxu0 0.0
    %515 = vmatpush1.msra.mxu0 0.0
    %516 = vmatprep.subr.mxu0 0.0
    %517 = vmatpush1.msra.mxu0 0.0
    %518 = vmatprep.subr.mxu0 0.0
    %519 = vmatpush1.msra.mxu0 0.0
    %520 = vmatprep.subr.mxu0 0.0
    %521 = vmatpush1.msra.mxu0 0.0
    %522 = vmatprep.subr.mxu0 0.0
    %523 = vmatpush1.msra.mxu0 0.0
    %524 = vmatprep.subr.mxu0 0.0
    %525 = vmatpush1.msra.mxu0 0.0
    %526 = vmatprep.subr.mxu0 0.0
    %527 = vmatpush1.msra.mxu0 0.0
    %528 = vmatprep.subr.mxu0 0.0
    %529 = vmatpush1.msra.mxu0 0.0
    %530 = vmatprep.subr.mxu0 0.0
    %531 = vmatpush1.msra.mxu0 0.0
    %532 = vmatprep.subr.mxu0 0.0
    %533 = vmatpush1.msra.mxu0 0.0
    %534 = vmatprep.subr.mxu0 0.0
    %535 = vmatpush1.msra.mxu0 0.0
    %536 = vmatprep.subr.mxu0 0.0
    %537 = vmatpush1.msra.mxu0 0.0
    %538 = vmatprep.subr.mxu0 0.0
    %539 = vmatpush1.msra.mxu0 0.0
    %540 = vmatprep.subr.mxu0 0.0
    %541 = vmatpush1.msra.mxu0 0.0
    %542 = vmatprep.subr.mxu0 0.0
    %543 = vmatpush1.msra.mxu0 0.0
    %544 = vmatprep.subr.mxu0 0.0
    %545 = vmatpush1.msra.mxu0 0.0
    %546 = vmatprep.subr.mxu0 0.0
    %547 = vmatpush1.msra.mxu0 0.0
    %548 = vmatprep.subr.mxu0 0.0
    %549 = vmatpush1.msra.mxu0 0.0
    %550 = vmatprep.subr.mxu0 0.0
    %551 = vmatpush1.msra.mxu0 0.0
    %552 = vmatprep.subr.mxu0 0.0
    %553 = vmatpush1.msra.mxu0 0.0
    %554 = vmatprep.subr.mxu0 0.0
    %555 = vmatpush1.msra.mxu0 0.0
    %556 = vmatprep.subr.mxu0 0.0
    %557 = vmatpush1.msra.mxu0 0.0
    %558 = vmatprep.mubr.f32.mxu0 0.0
    %559 = vmatmul.mubr.f32.gmra.mrb[0].mxu0 %v270
    %v560 = vpop.f32.mrb[0].mxu0
    %v561 = vadd.f32 0.0, %v560
    %v562 = vpop.f32.mrb[0].mxu0
    %563 = vmatprep.mubr.f32.mxu0 0.0
    %564 = vmatmul.mubr.f32.gmra.mrb[0].mxu0 %v273
    %v565 = vpop.f32.mrb[0].mxu0
    %v566 = vadd.f32 0.0, %v565
    %v567 = vpop.f32.mrb[0].mxu0
    %568 = vmatprep.mubr.f32.mxu0 0.0
    %569 = vmatmul.mubr.f32.gmra.mrb[0].mxu0 %v276
    %v570 = vpop.f32.mrb[0].mxu0
    %v571 = vadd.f32 0.0, %v570
    %v572 = vpop.f32.mrb[0].mxu0
    %573 = vmatprep.mubr.f32.mxu0 0.0
    %574 = vmatmul.mubr.f32.gmra.mrb[0].mxu0 %v279
    %v575 = vpop.f32.mrb[0].mxu0
    %v576 = vadd.f32 0.0, %v575
    %v577 = vpop.f32.mrb[0].mxu0
    %578 = vdwg.mxu0
    %v579 = vsub.f32 %v561, %v251
    %v580 = vsub.f32 %v566, %v256
    %v581 = vsub.f32 %v571, %v261
    %v582 = vsub.f32 %v576, %v266
    %vm583 = vcmp.lt.f32.partialorder 2.0, %v32
    %v584 = vsel %vm583, 1, 0
    %v585 = vlaneseq
    %v586 = vshrl.u32 %v585, 7
    %v587 = vsub.s32 2, %v586
    %v588 = vrot.slane %v584, %v587
    %vm589 = vcmp.eq.s32.totalorder %v588, 1
    %v590 = vsel %vm589, %v579, 0.0
    %v591 = vsel %vm589, %v580, 0.0
    %v592 = vsel %vm589, %v581, 0.0
    %v593 = vsel %vm589, %v582, 0.0
    %v594 = vmax.f32 %v487, %v590
    %v595 = vmax.f32 %v488, %v591
    %v596 = vmax.f32 %v489, %v592
    %v597 = vmax.f32 %v490, %v593
    %v599 = vsel %vm37, %v27, 0
    %601 = vmatprep.subr.mxu0 0.0
    %602 = vmatpush1.msra.mxu0 %v599
    %603 = vmatprep.subr.mxu0 0.0
    %604 = vmatpush1.msra.mxu0 0.0
    %605 = vmatprep.subr.mxu0 0.0
    %606 = vmatpush1.msra.mxu0 0.0
    %607 = vmatprep.subr.mxu0 0.0
    %608 = vmatpush1.msra.mxu0 0.0
    %609 = vmatprep.subr.mxu0 0.0
    %610 = vmatpush1.msra.mxu0 0.0
    %611 = vmatprep.subr.mxu0 0.0
    %612 = vmatpush1.msra.mxu0 0.0
    %613 = vmatprep.subr.mxu0 0.0
    %614 = vmatpush1.msra.mxu0 0.0
    %615 = vmatprep.subr.mxu0 0.0
    %616 = vmatpush1.msra.mxu0 0.0
    %617 = vmatprep.subr.mxu0 0.0
    %618 = vmatpush1.msra.mxu0 0.0
    %619 = vmatprep.subr.mxu0 0.0
    %620 = vmatpush1.msra.mxu0 0.0
    %621 = vmatprep.subr.mxu0 0.0
    %622 = vmatpush1.msra.mxu0 0.0
    %623 = vmatprep.subr.mxu0 0.0
    %624 = vmatpush1.msra.mxu0 0.0
    %625 = vmatprep.subr.mxu0 0.0
    %626 = vmatpush1.msra.mxu0 0.0
    %627 = vmatprep.subr.mxu0 0.0
    %628 = vmatpush1.msra.mxu0 0.0
    %629 = vmatprep.subr.mxu0 0.0
    %630 = vmatpush1.msra.mxu0 0.0
    %631 = vmatprep.subr.mxu0 0.0
    %632 = vmatpush1.msra.mxu0 0.0
    %633 = vmatprep.subr.mxu0 0.0
    %634 = vmatpush1.msra.mxu0 0.0
    %635 = vmatprep.subr.mxu0 0.0
    %636 = vmatpush1.msra.mxu0 0.0
    %637 = vmatprep.subr.mxu0 0.0
    %638 = vmatpush1.msra.mxu0 0.0
    %639 = vmatprep.subr.mxu0 0.0
    %640 = vmatpush1.msra.mxu0 0.0
    %641 = vmatprep.subr.mxu0 0.0
    %642 = vmatpush1.msra.mxu0 0.0
    %643 = vmatprep.subr.mxu0 0.0
    %644 = vmatpush1.msra.mxu0 0.0
    %645 = vmatprep.subr.mxu0 0.0
    %646 = vmatpush1.msra.mxu0 0.0
    %647 = vmatprep.subr.mxu0 0.0
    %648 = vmatpush1.msra.mxu0 0.0
    %649 = vmatprep.subr.mxu0 0.0
    %650 = vmatpush1.msra.mxu0 0.0
    %651 = vmatprep.subr.mxu0 0.0
    %652 = vmatpush1.msra.mxu0 0.0
    %653 = vmatprep.subr.mxu0 0.0
    %654 = vmatpush1.msra.mxu0 0.0
    %655 = vmatprep.subr.mxu0 0.0
    %656 = vmatpush1.msra.mxu0 0.0
    %657 = vmatprep.subr.mxu0 0.0
    %658 = vmatpush1.msra.mxu0 0.0
    %659 = vmatprep.subr.mxu0 0.0
    %660 = vmatpush1.msra.mxu0 0.0
    %661 = vmatprep.subr.mxu0 0.0
    %662 = vmatpush1.msra.mxu0 0.0
    %663 = vmatprep.subr.mxu0 0.0
    %664 = vmatpush1.msra.mxu0 0.0
    %665 = vmatprep.mubr.f32.mxu0 0.0
    %666 = vmatmul.mubr.f32.gmra.mrb[0].mxu0 %v270
    %v667 = vpop.f32.mrb[0].mxu0
    %v668 = vadd.f32 0.0, %v667
    %v669 = vpop.f32.mrb[0].mxu0
    %670 = vmatprep.mubr.f32.mxu0 0.0
    %671 = vmatmul.mubr.f32.gmra.mrb[0].mxu0 %v273
    %v672 = vpop.f32.mrb[0].mxu0
    %v673 = vadd.f32 0.0, %v672
    %v674 = vpop.f32.mrb[0].mxu0
    %675 = vmatprep.mubr.f32.mxu0 0.0
    %676 = vmatmul.mubr.f32.gmra.mrb[0].mxu0 %v276
    %v677 = vpop.f32.mrb[0].mxu0
    %v678 = vadd.f32 0.0, %v677
    %v679 = vpop.f32.mrb[0].mxu0
    %680 = vmatprep.mubr.f32.mxu0 0.0
    %681 = vmatmul.mubr.f32.gmra.mrb[0].mxu0 %v279
    %v682 = vpop.f32.mrb[0].mxu0
    %v683 = vadd.f32 0.0, %v682
    %v684 = vpop.f32.mrb[0].mxu0
    %685 = vdwg.mxu0
    %v686 = vsub.f32 %v668, %v251
    %v687 = vsub.f32 %v673, %v256
    %v688 = vsub.f32 %v678, %v261
    %v689 = vsub.f32 %v683, %v266
    %vm690 = vcmp.lt.f32.partialorder 3.0, %v32
    %v691 = vsel %vm690, 1, 0
    %v692 = vlaneseq
    %v693 = vshrl.u32 %v692, 7
    %v694 = vsub.s32 2, %v693
    %v695 = vrot.slane %v691, %v694
    %vm696 = vcmp.eq.s32.totalorder %v695, 1
    %v697 = vsel %vm696, %v686, 0.0
    %v698 = vsel %vm696, %v687, 0.0
    %v699 = vsel %vm696, %v688, 0.0
    %v700 = vsel %vm696, %v689, 0.0
    %v701 = vmax.f32 %v594, %v697
    %v702 = vmax.f32 %v595, %v698
    %v703 = vmax.f32 %v596, %v699
    %v704 = vmax.f32 %v597, %v700
    %v706 = vsel %vm37, %v28, 0
    %708 = vmatprep.subr.mxu0 0.0
    %709 = vmatpush1.msra.mxu0 %v706
    %710 = vmatprep.subr.mxu0 0.0
    %711 = vmatpush1.msra.mxu0 0.0
    %712 = vmatprep.subr.mxu0 0.0
    %713 = vmatpush1.msra.mxu0 0.0
    %714 = vmatprep.subr.mxu0 0.0
    %715 = vmatpush1.msra.mxu0 0.0
    %716 = vmatprep.subr.mxu0 0.0
    %717 = vmatpush1.msra.mxu0 0.0
    %718 = vmatprep.subr.mxu0 0.0
    %719 = vmatpush1.msra.mxu0 0.0
    %720 = vmatprep.subr.mxu0 0.0
    %721 = vmatpush1.msra.mxu0 0.0
    %722 = vmatprep.subr.mxu0 0.0
    %723 = vmatpush1.msra.mxu0 0.0
    %724 = vmatprep.subr.mxu0 0.0
    %725 = vmatpush1.msra.mxu0 0.0
    %726 = vmatprep.subr.mxu0 0.0
    %727 = vmatpush1.msra.mxu0 0.0
    %728 = vmatprep.subr.mxu0 0.0
    %729 = vmatpush1.msra.mxu0 0.0
    %730 = vmatprep.subr.mxu0 0.0
    %731 = vmatpush1.msra.mxu0 0.0
    %732 = vmatprep.subr.mxu0 0.0
    %733 = vmatpush1.msra.mxu0 0.0
    %734 = vmatprep.subr.mxu0 0.0
    %735 = vmatpush1.msra.mxu0 0.0
    %736 = vmatprep.subr.mxu0 0.0
    %737 = vmatpush1.msra.mxu0 0.0
    %738 = vmatprep.subr.mxu0 0.0
    %739 = vmatpush1.msra.mxu0 0.0
    %740 = vmatprep.subr.mxu0 0.0
    %741 = vmatpush1.msra.mxu0 0.0
    %742 = vmatprep.subr.mxu0 0.0
    %743 = vmatpush1.msra.mxu0 0.0
    %744 = vmatprep.subr.mxu0 0.0
    %745 = vmatpush1.msra.mxu0 0.0
    %746 = vmatprep.subr.mxu0 0.0
    %747 = vmatpush1.msra.mxu0 0.0
    %748 = vmatprep.subr.mxu0 0.0
    %749 = vmatpush1.msra.mxu0 0.0
    %750 = vmatprep.subr.mxu0 0.0
    %751 = vmatpush1.msra.mxu0 0.0
    %752 = vmatprep.subr.mxu0 0.0
    %753 = vmatpush1.msra.mxu0 0.0
    %754 = vmatprep.subr.mxu0 0.0
    %755 = vmatpush1.msra.mxu0 0.0
    %756 = vmatprep.subr.mxu0 0.0
    %757 = vmatpush1.msra.mxu0 0.0
    %758 = vmatprep.subr.mxu0 0.0
    %759 = vmatpush1.msra.mxu0 0.0
    %760 = vmatprep.subr.mxu0 0.0
    %761 = vmatpush1.msra.mxu0 0.0
    %762 = vmatprep.subr.mxu0 0.0
    %763 = vmatpush1.msra.mxu0 0.0
    %764 = vmatprep.subr.mxu0 0.0
    %765 = vmatpush1.msra.mxu0 0.0
    %766 = vmatprep.subr.mxu0 0.0
    %767 = vmatpush1.msra.mxu0 0.0
    %768 = vmatprep.subr.mxu0 0.0
    %769 = vmatpush1.msra.mxu0 0.0
    %770 = vmatprep.subr.mxu0 0.0
    %771 = vmatpush1.msra.mxu0 0.0
    %772 = vmatprep.mubr.f32.mxu0 0.0
    %773 = vmatmul.mubr.f32.gmra.mrb[0].mxu0 %v270
    %v774 = vpop.f32.mrb[0].mxu0
    %v775 = vadd.f32 0.0, %v774
    %v776 = vpop.f32.mrb[0].mxu0
    %777 = vmatprep.mubr.f32.mxu0 0.0
    %778 = vmatmul.mubr.f32.gmra.mrb[0].mxu0 %v273
    %v779 = vpop.f32.mrb[0].mxu0
    %v780 = vadd.f32 0.0, %v779
    %v781 = vpop.f32.mrb[0].mxu0
    %782 = vmatprep.mubr.f32.mxu0 0.0
    %783 = vmatmul.mubr.f32.gmra.mrb[0].mxu0 %v276
    %v784 = vpop.f32.mrb[0].mxu0
    %v785 = vadd.f32 0.0, %v784
    %v786 = vpop.f32.mrb[0].mxu0
    %787 = vmatprep.mubr.f32.mxu0 0.0
    %788 = vmatmul.mubr.f32.gmra.mrb[0].mxu0 %v279
    %v789 = vpop.f32.mrb[0].mxu0
    %v790 = vadd.f32 0.0, %v789
    %v791 = vpop.f32.mrb[0].mxu0
    %792 = vdwg.mxu0
    %v793 = vsub.f32 %v775, %v251
    %v794 = vsub.f32 %v780, %v256
    %v795 = vsub.f32 %v785, %v261
    %v796 = vsub.f32 %v790, %v266
    %vm797 = vcmp.lt.f32.partialorder 4.0, %v32
    %v798 = vsel %vm797, 1, 0
    %v799 = vlaneseq
    %v800 = vshrl.u32 %v799, 7
    %v801 = vsub.s32 2, %v800
    %v802 = vrot.slane %v798, %v801
    %vm803 = vcmp.eq.s32.totalorder %v802, 1
    %v804 = vsel %vm803, %v793, 0.0
    %v805 = vsel %vm803, %v794, 0.0
    %v806 = vsel %vm803, %v795, 0.0
    %v807 = vsel %vm803, %v796, 0.0
    %v808 = vmax.f32 %v701, %v804
    %v809 = vmax.f32 %v702, %v805
    %v810 = vmax.f32 %v703, %v806
    %v811 = vmax.f32 %v704, %v807
    %v813 = vsel %vm37, %v29, 0
    %815 = vmatprep.subr.mxu0 0.0
    %816 = vmatpush1.msra.mxu0 %v813
    %817 = vmatprep.subr.mxu0 0.0
    %818 = vmatpush1.msra.mxu0 0.0
    %819 = vmatprep.subr.mxu0 0.0
    %820 = vmatpush1.msra.mxu0 0.0
    %821 = vmatprep.subr.mxu0 0.0
    %822 = vmatpush1.msra.mxu0 0.0
    %823 = vmatprep.subr.mxu0 0.0
    %824 = vmatpush1.msra.mxu0 0.0
    %825 = vmatprep.subr.mxu0 0.0
    %826 = vmatpush1.msra.mxu0 0.0
    %827 = vmatprep.subr.mxu0 0.0
    %828 = vmatpush1.msra.mxu0 0.0
    %829 = vmatprep.subr.mxu0 0.0
    %830 = vmatpush1.msra.mxu0 0.0
    %831 = vmatprep.subr.mxu0 0.0
    %832 = vmatpush1.msra.mxu0 0.0
    %833 = vmatprep.subr.mxu0 0.0
    %834 = vmatpush1.msra.mxu0 0.0
    %835 = vmatprep.subr.mxu0 0.0
    %836 = vmatpush1.msra.mxu0 0.0
    %837 = vmatprep.subr.mxu0 0.0
    %838 = vmatpush1.msra.mxu0 0.0
    %839 = vmatprep.subr.mxu0 0.0
    %840 = vmatpush1.msra.mxu0 0.0
    %841 = vmatprep.subr.mxu0 0.0
    %842 = vmatpush1.msra.mxu0 0.0
    %843 = vmatprep.subr.mxu0 0.0
    %844 = vmatpush1.msra.mxu0 0.0
    %845 = vmatprep.subr.mxu0 0.0
    %846 = vmatpush1.msra.mxu0 0.0
    %847 = vmatprep.subr.mxu0 0.0
    %848 = vmatpush1.msra.mxu0 0.0
    %849 = vmatprep.subr.mxu0 0.0
    %850 = vmatpush1.msra.mxu0 0.0
    %851 = vmatprep.subr.mxu0 0.0
    %852 = vmatpush1.msra.mxu0 0.0
    %853 = vmatprep.subr.mxu0 0.0
    %854 = vmatpush1.msra.mxu0 0.0
    %855 = vmatprep.subr.mxu0 0.0
    %856 = vmatpush1.msra.mxu0 0.0
    %857 = vmatprep.subr.mxu0 0.0
    %858 = vmatpush1.msra.mxu0 0.0
    %859 = vmatprep.subr.mxu0 0.0
    %860 = vmatpush1.msra.mxu0 0.0
    %861 = vmatprep.subr.mxu0 0.0
    %862 = vmatpush1.msra.mxu0 0.0
    %863 = vmatprep.subr.mxu0 0.0
    %864 = vmatpush1.msra.mxu0 0.0
    %865 = vmatprep.subr.mxu0 0.0
    %866 = vmatpush1.msra.mxu0 0.0
    %867 = vmatprep.subr.mxu0 0.0
    %868 = vmatpush1.msra.mxu0 0.0
    %869 = vmatprep.subr.mxu0 0.0
    %870 = vmatpush1.msra.mxu0 0.0
    %871 = vmatprep.subr.mxu0 0.0
    %872 = vmatpush1.msra.mxu0 0.0
    %873 = vmatprep.subr.mxu0 0.0
    %874 = vmatpush1.msra.mxu0 0.0
    %875 = vmatprep.subr.mxu0 0.0
    %876 = vmatpush1.msra.mxu0 0.0
    %877 = vmatprep.subr.mxu0 0.0
    %878 = vmatpush1.msra.mxu0 0.0
    %879 = vmatprep.mubr.f32.mxu0 0.0
    %880 = vmatmul.mubr.f32.gmra.mrb[0].mxu0 %v270
    %v881 = vpop.f32.mrb[0].mxu0
    %v882 = vadd.f32 0.0, %v881
    %v883 = vpop.f32.mrb[0].mxu0
    %884 = vmatprep.mubr.f32.mxu0 0.0
    %885 = vmatmul.mubr.f32.gmra.mrb[0].mxu0 %v273
    %v886 = vpop.f32.mrb[0].mxu0
    %v887 = vadd.f32 0.0, %v886
    %v888 = vpop.f32.mrb[0].mxu0
    %889 = vmatprep.mubr.f32.mxu0 0.0
    %890 = vmatmul.mubr.f32.gmra.mrb[0].mxu0 %v276
    %v891 = vpop.f32.mrb[0].mxu0
    %v892 = vadd.f32 0.0, %v891
    %v893 = vpop.f32.mrb[0].mxu0
    %894 = vmatprep.mubr.f32.mxu0 0.0
    %895 = vmatmul.mubr.f32.gmra.mrb[0].mxu0 %v279
    %v896 = vpop.f32.mrb[0].mxu0
    %v897 = vadd.f32 0.0, %v896
    %v898 = vpop.f32.mrb[0].mxu0
    %899 = vdwg.mxu0
    %v900 = vsub.f32 %v882, %v251
    %v901 = vsub.f32 %v887, %v256
    %v902 = vsub.f32 %v892, %v261
    %v903 = vsub.f32 %v897, %v266
    %vm904 = vcmp.lt.f32.partialorder 5.0, %v32
    %v905 = vsel %vm904, 1, 0
    %v906 = vlaneseq
    %v907 = vshrl.u32 %v906, 7
    %v908 = vsub.s32 2, %v907
    %v909 = vrot.slane %v905, %v908
    %vm910 = vcmp.eq.s32.totalorder %v909, 1
    %v911 = vsel %vm910, %v900, 0.0
    %v912 = vsel %vm910, %v901, 0.0
    %v913 = vsel %vm910, %v902, 0.0
    %v914 = vsel %vm910, %v903, 0.0
    %v915 = vmax.f32 %v808, %v911
    %v916 = vmax.f32 %v809, %v912
    %v917 = vmax.f32 %v810, %v913
    %v918 = vmax.f32 %v811, %v914
    %v920 = vsel %vm37, %v30, 0
    %922 = vmatprep.subr.mxu0 0.0
    %923 = vmatpush1.msra.mxu0 %v920
    %924 = vmatprep.subr.mxu0 0.0
    %925 = vmatpush1.msra.mxu0 0.0
    %926 = vmatprep.subr.mxu0 0.0
    %927 = vmatpush1.msra.mxu0 0.0
    %928 = vmatprep.subr.mxu0 0.0
    %929 = vmatpush1.msra.mxu0 0.0
    %930 = vmatprep.subr.mxu0 0.0
    %931 = vmatpush1.msra.mxu0 0.0
    %932 = vmatprep.subr.mxu0 0.0
    %933 = vmatpush1.msra.mxu0 0.0
    %934 = vmatprep.subr.mxu0 0.0
    %935 = vmatpush1.msra.mxu0 0.0
    %936 = vmatprep.subr.mxu0 0.0
    %937 = vmatpush1.msra.mxu0 0.0
    %938 = vmatprep.subr.mxu0 0.0
    %939 = vmatpush1.msra.mxu0 0.0
    %940 = vmatprep.subr.mxu0 0.0
    %941 = vmatpush1.msra.mxu0 0.0
    %942 = vmatprep.subr.mxu0 0.0
    %943 = vmatpush1.msra.mxu0 0.0
    %944 = vmatprep.subr.mxu0 0.0
    %945 = vmatpush1.msra.mxu0 0.0
    %946 = vmatprep.subr.mxu0 0.0
    %947 = vmatpush1.msra.mxu0 0.0
    %948 = vmatprep.subr.mxu0 0.0
    %949 = vmatpush1.msra.mxu0 0.0
    %950 = vmatprep.subr.mxu0 0.0
    %951 = vmatpush1.msra.mxu0 0.0
    %952 = vmatprep.subr.mxu0 0.0
    %953 = vmatpush1.msra.mxu0 0.0
    %954 = vmatprep.subr.mxu0 0.0
    %955 = vmatpush1.msra.mxu0 0.0
    %956 = vmatprep.subr.mxu0 0.0
    %957 = vmatpush1.msra.mxu0 0.0
    %958 = vmatprep.subr.mxu0 0.0
    %959 = vmatpush1.msra.mxu0 0.0
    %960 = vmatprep.subr.mxu0 0.0
    %961 = vmatpush1.msra.mxu0 0.0
    %962 = vmatprep.subr.mxu0 0.0
    %963 = vmatpush1.msra.mxu0 0.0
    %964 = vmatprep.subr.mxu0 0.0
    %965 = vmatpush1.msra.mxu0 0.0
    %966 = vmatprep.subr.mxu0 0.0
    %967 = vmatpush1.msra.mxu0 0.0
    %968 = vmatprep.subr.mxu0 0.0
    %969 = vmatpush1.msra.mxu0 0.0
    %970 = vmatprep.subr.mxu0 0.0
    %971 = vmatpush1.msra.mxu0 0.0
    %972 = vmatprep.subr.mxu0 0.0
    %973 = vmatpush1.msra.mxu0 0.0
    %974 = vmatprep.subr.mxu0 0.0
    %975 = vmatpush1.msra.mxu0 0.0
    %976 = vmatprep.subr.mxu0 0.0
    %977 = vmatpush1.msra.mxu0 0.0
    %978 = vmatprep.subr.mxu0 0.0
    %979 = vmatpush1.msra.mxu0 0.0
    %980 = vmatprep.subr.mxu0 0.0
    %981 = vmatpush1.msra.mxu0 0.0
    %982 = vmatprep.subr.mxu0 0.0
    %983 = vmatpush1.msra.mxu0 0.0
    %984 = vmatprep.subr.mxu0 0.0
    %985 = vmatpush1.msra.mxu0 0.0
    %986 = vmatprep.mubr.f32.mxu0 0.0
    %987 = vmatmul.mubr.f32.gmra.mrb[0].mxu0 %v270
    %v988 = vpop.f32.mrb[0].mxu0
    %v989 = vadd.f32 0.0, %v988
    %v990 = vpop.f32.mrb[0].mxu0
    %991 = vmatprep.mubr.f32.mxu0 0.0
    %992 = vmatmul.mubr.f32.gmra.mrb[0].mxu0 %v273
    %v993 = vpop.f32.mrb[0].mxu0
    %v994 = vadd.f32 0.0, %v993
    %v995 = vpop.f32.mrb[0].mxu0
    %996 = vmatprep.mubr.f32.mxu0 0.0
    %997 = vmatmul.mubr.f32.gmra.mrb[0].mxu0 %v276
    %v998 = vpop.f32.mrb[0].mxu0
    %v999 = vadd.f32 0.0, %v998
    %v1000 = vpop.f32.mrb[0].mxu0
    %1001 = vmatprep.mubr.f32.mxu0 0.0
    %1002 = vmatmul.mubr.f32.gmra.mrb[0].mxu0 %v279
    %v1003 = vpop.f32.mrb[0].mxu0
    %v1004 = vadd.f32 0.0, %v1003
    %v1005 = vpop.f32.mrb[0].mxu0
    %1006 = vdwg.mxu0
    %v1007 = vsub.f32 %v989, %v251
    %v1008 = vsub.f32 %v994, %v256
    %v1009 = vsub.f32 %v999, %v261
    %v1010 = vsub.f32 %v1004, %v266
    %vm1011 = vcmp.lt.f32.partialorder 6.0, %v32
    %v1012 = vsel %vm1011, 1, 0
    %v1013 = vlaneseq
    %v1014 = vshrl.u32 %v1013, 7
    %v1015 = vsub.s32 2, %v1014
    %v1016 = vrot.slane %v1012, %v1015
    %vm1017 = vcmp.eq.s32.totalorder %v1016, 1
    %v1018 = vsel %vm1017, %v1007, 0.0
    %v1019 = vsel %vm1017, %v1008, 0.0
    %v1020 = vsel %vm1017, %v1009, 0.0
    %v1021 = vsel %vm1017, %v1010, 0.0
    %v1022 = vmax.f32 %v915, %v1018
    %v1023 = vmax.f32 %v916, %v1019
    %v1024 = vmax.f32 %v917, %v1020
    %v1025 = vmax.f32 %v918, %v1021
    %v1027 = vsel %vm37, %v31, 0
    %1029 = vmatprep.subr.mxu0 0.0
    %1030 = vmatpush1.msra.mxu0 %v1027
    %1031 = vmatprep.subr.mxu0 0.0
    %1032 = vmatpush1.msra.mxu0 0.0
    %1033 = vmatprep.subr.mxu0 0.0
    %1034 = vmatpush1.msra.mxu0 0.0
    %1035 = vmatprep.subr.mxu0 0.0
    %1036 = vmatpush1.msra.mxu0 0.0
    %1037 = vmatprep.subr.mxu0 0.0
    %1038 = vmatpush1.msra.mxu0 0.0
    %1039 = vmatprep.subr.mxu0 0.0
    %1040 = vmatpush1.msra.mxu0 0.0
    %1041 = vmatprep.subr.mxu0 0.0
    %1042 = vmatpush1.msra.mxu0 0.0
    %1043 = vmatprep.subr.mxu0 0.0
    %1044 = vmatpush1.msra.mxu0 0.0
    %1045 = vmatprep.subr.mxu0 0.0
    %1046 = vmatpush1.msra.mxu0 0.0
    %1047 = vmatprep.subr.mxu0 0.0
    %1048 = vmatpush1.msra.mxu0 0.0
    %1049 = vmatprep.subr.mxu0 0.0
    %1050 = vmatpush1.msra.mxu0 0.0
    %1051 = vmatprep.subr.mxu0 0.0
    %1052 = vmatpush1.msra.mxu0 0.0
    %1053 = vmatprep.subr.mxu0 0.0
    %1054 = vmatpush1.msra.mxu0 0.0
    %1055 = vmatprep.subr.mxu0 0.0
    %1056 = vmatpush1.msra.mxu0 0.0
    %1057 = vmatprep.subr.mxu0 0.0
    %1058 = vmatpush1.msra.mxu0 0.0
    %1059 = vmatprep.subr.mxu0 0.0
    %1060 = vmatpush1.msra.mxu0 0.0
    %1061 = vmatprep.subr.mxu0 0.0
    %1062 = vmatpush1.msra.mxu0 0.0
    %1063 = vmatprep.subr.mxu0 0.0
    %1064 = vmatpush1.msra.mxu0 0.0
    %1065 = vmatprep.subr.mxu0 0.0
    %1066 = vmatpush1.msra.mxu0 0.0
    %1067 = vmatprep.subr.mxu0 0.0
    %1068 = vmatpush1.msra.mxu0 0.0
    %1069 = vmatprep.subr.mxu0 0.0
    %1070 = vmatpush1.msra.mxu0 0.0
    %1071 = vmatprep.subr.mxu0 0.0
    %1072 = vmatpush1.msra.mxu0 0.0
    %1073 = vmatprep.subr.mxu0 0.0
    %1074 = vmatpush1.msra.mxu0 0.0
    %1075 = vmatprep.subr.mxu0 0.0
    %1076 = vmatpush1.msra.mxu0 0.0
    %1077 = vmatprep.subr.mxu0 0.0
    %1078 = vmatpush1.msra.mxu0 0.0
    %1079 = vmatprep.subr.mxu0 0.0
    %1080 = vmatpush1.msra.mxu0 0.0
    %1081 = vmatprep.subr.mxu0 0.0
    %1082 = vmatpush1.msra.mxu0 0.0
    %1083 = vmatprep.subr.mxu0 0.0
    %1084 = vmatpush1.msra.mxu0 0.0
    %1085 = vmatprep.subr.mxu0 0.0
    %1086 = vmatpush1.msra.mxu0 0.0
    %1087 = vmatprep.subr.mxu0 0.0
    %1088 = vmatpush1.msra.mxu0 0.0
    %1089 = vmatprep.subr.mxu0 0.0
    %1090 = vmatpush1.msra.mxu0 0.0
    %1091 = vmatprep.subr.mxu0 0.0
    %1092 = vmatpush1.msra.mxu0 0.0
    %1093 = vmatprep.mubr.f32.mxu0 0.0
    %1094 = vmatmul.mubr.f32.gmra.mrb[0].mxu0 %v270
    %v1095 = vpop.f32.mrb[0].mxu0
    %v1096 = vadd.f32 0.0, %v1095
    %v1097 = vpop.f32.mrb[0].mxu0
    %1098 = vmatprep.mubr.f32.mxu0 0.0
    %1099 = vmatmul.mubr.f32.gmra.mrb[0].mxu0 %v273
    %v1100 = vpop.f32.mrb[0].mxu0
    %v1101 = vadd.f32 0.0, %v1100
    %v1102 = vpop.f32.mrb[0].mxu0
    %1103 = vmatprep.mubr.f32.mxu0 0.0
    %1104 = vmatmul.mubr.f32.gmra.mrb[0].mxu0 %v276
    %v1105 = vpop.f32.mrb[0].mxu0
    %v1106 = vadd.f32 0.0, %v1105
    %v1107 = vpop.f32.mrb[0].mxu0
    %1108 = vmatprep.mubr.f32.mxu0 0.0
    %1109 = vmatmul.mubr.f32.gmra.mrb[0].mxu0 %v279
    %v1110 = vpop.f32.mrb[0].mxu0
    %v1111 = vadd.f32 0.0, %v1110
    %v1112 = vpop.f32.mrb[0].mxu0
    %1113 = vdwg.mxu0
    %v1114 = vsub.f32 %v1096, %v251
    %v1115 = vsub.f32 %v1101, %v256
    %v1116 = vsub.f32 %v1106, %v261
    %v1117 = vsub.f32 %v1111, %v266
    %vm1118 = vcmp.lt.f32.partialorder 7.0, %v32
    %v1119 = vsel %vm1118, 1, 0
    %v1120 = vlaneseq
    %v1121 = vshrl.u32 %v1120, 7
    %v1122 = vsub.s32 2, %v1121
    %v1123 = vrot.slane %v1119, %v1122
    %vm1124 = vcmp.eq.s32.totalorder %v1123, 1
    %v1125 = vsel %vm1124, %v1114, 0.0
    %v1126 = vsel %vm1124, %v1115, 0.0
    %v1127 = vsel %vm1124, %v1116, 0.0
    %v1128 = vsel %vm1124, %v1117, 0.0
    %v1129 = vmax.f32 %v1022, %v1125
    %v1130 = vmax.f32 %v1023, %v1126
    %v1131 = vmax.f32 %v1024, %v1127
    %v1132 = vmax.f32 %v1025, %v1128
    %v1133 = vld [vmem:[%s5] sm:$0xff]
    %v1134 = vld [vmem:[%s5 + $0x8] sm:$0xff]
    %v1135 = vld [vmem:[%s5 + $0x10] sm:$0xff]
    %v1136 = vld [vmem:[%s5 + $0x18] sm:$0xff]
    %1138 = vset.pattern.permute.xlu0 0
    %1139 = vperm.xlu0 %1138, %v1133
    %v1140 = vpop.permute.xlu0 %1139
    %1143 = vset.pattern.permute.xlu0 0
    %1144 = vperm.xlu0 %1143, %v1134
    %v1145 = vpop.permute.xlu0 %1144
    %1148 = vset.pattern.permute.xlu0 0
    %1149 = vperm.xlu0 %1148, %v1135
    %v1150 = vpop.permute.xlu0 %1149
    %1153 = vset.pattern.permute.xlu0 0
    %1154 = vperm.xlu0 %1153, %v1136
    %v1155 = vpop.permute.xlu0 %1154
    %v1157 = vadd.f32 %v1129, %v1140
    %v1158 = vadd.f32 %v1130, %v1145
    %v1159 = vadd.f32 %v1131, %v1150
    %v1160 = vadd.f32 %v1132, %v1155
    %v1161 = vmax.f32 %v1157, 0.0
    %v1162 = vmax.f32 %v1158, 0.0
    %v1163 = vmax.f32 %v1159, 0.0
    %v1164 = vmax.f32 %v1160, 0.0
    %1165 = vst [vmem:[#allocation2] sm:$0xff] %v1161
    %1166 = vst [vmem:[#allocation2 + $0x8] sm:$0xff] %v1162
    %1167 = vst [vmem:[#allocation2 + $0x10] sm:$0xff] %v1163
    %1168 = vst [vmem:[#allocation2 + $0x18] sm:$0xff] %v1164
    // Predicated region
    $region26: #{tpu_custom_call.1} parent=1 // pred_check
      _
    $region27: #{tpu_custom_call.1} parent=1 // pred_check_branch
      %1170 = sbr.rel (0) target = $region29
    $region28: #{tpu_custom_call.1} parent=1 // pred_region
      %s1172 = ssub.s32 512, 512
      %1173 = vsyncadd [#allocation3], %s1172
      %s1174 = sshll.u32 [#allocation2], 4
      %s1175 = int_to_ptr.vmem [resolvable:$true] %s1174
      %1180 = dma.vmem_to_hbm [thread:$0]  %s1175, 512, %s6, [#allocation3], 128, 128, 8
    $region29: #{tpu_custom_call.1} parent=1 // pred_fallthru
      _
    // Predicated region
    $region30: #{tpu_custom_call.1} parent=1 // pred_check
      _
    $region31: #{tpu_custom_call.1} parent=1 // pred_check_branch
      %1182 = sbr.rel (0) target = $region33
    $region32: #{tpu_custom_call.1} parent=1 // pred_region
      %1183 = dma.done [#allocation3], 512
    $region33: #{tpu_custom_call.1} parent=1 // pred_fallthru
      _
    %1184 = vsyncpa [#allocation3], 1

</llo_original>
